<compile_context>
chip_gen: v7x
topology: tpu7x:2x2x1
jax: 0.10.0
libtpu: 0.0.40
codegen_flags: <defaults>
</compile_context>

<pallas_src>
import functools

import jax
import jax.numpy as jnp
import numpy as np
from jax.experimental import pallas as pl
from jax.experimental.pallas import tpu as pltpu  # noqa: F401  (TPU backend)

_LANE = 128   # lane-dense output width: pi in cols [0, A), value at col A


def _round_up(x, m):
    return (x + m - 1) // m * m


def _slab_layout(cin):
    """Row offsets of each weight section in the packed [K_total, 128] slab.

    Sections: conv1 (9*cin x 32), conv2 (128 x 64), conv3 (256 x 64),
    fc4 (256 x 128, rows pre-permuted to (pixel, channel)), fc5|fc6 packed
    (128 x 128).  Every section starts at an 8-aligned sublane offset.
    """
    o1 = 0
    o2 = _round_up(o1 + 9 * cin, 8)
    o3 = o2 + 128
    o4 = o3 + 256
    o5 = o4 + 256
    total = o5 + 128
    return o1, o2, o3, o4, o5, total


# ---------------------------------------------------------------------------
# Fused forward kernel (everything vreg-resident; single output store)
# ---------------------------------------------------------------------------
def _fused_forward_kernel(cols1_ref, w_ref, b_ref, out_ref, *,
                          batch, cin, num_action):
    f32 = jnp.float32
    B = batch
    o1, o2, o3, o4, o5, _ = _slab_layout(cin)
    k1 = 9 * cin

    # Hoisted bias rows (one [8,128] slab input).
    b1 = b_ref[0:1, 0:32]
    b2 = b_ref[1:2, 0:64]
    b3 = b_ref[2:3, 0:64]
    b4 = b_ref[3:4, :]
    b56 = b_ref[4:5, :]

    # ---- conv1: im2col was built lane-dense in the wrapper ------------------
    # cols1 rows ordered (p1, b) over the 4x4 conv1 output grid,
    # columns ordered (kh, kw, cin).
    y1 = jnp.dot(cols1_ref[...], w_ref[o1:o1 + k1, 0:32],
                 preferred_element_type=f32)
    y1 = jnp.maximum(y1 + b1, 0.0)                         # [16*B, 32]

    # ---- conv2 (k=2, s=1, 4x4 -> 3x3): shift-and-accumulate -----------------
    # y2 kept as 3 per-grid-row values [3*B, 64], rows ordered (j2, b).
    y2_rows = []
    for i2 in range(3):
        acc = None
        for kh in range(2):
            base = (i2 + kh) * 4 * B           # start row of y1 grid row i2+kh
            for kw in range(2):
                lhs = y1[base + kw * B: base + (kw + 3) * B, :]     # [3B, 32]
                t = kh * 2 + kw
                prod = jnp.dot(lhs, w_ref[o2 + t * 32:o2 + (t + 1) * 32, 0:64],
                               preferred_element_type=f32)
                acc = prod if acc is None else acc + prod
        y2_rows.append(jnp.maximum(acc + b2, 0.0))

    # ---- conv3 (k=2, s=1, 3x3 -> 2x2): shift-and-accumulate -----------------
    # y3 kept as 2 per-grid-row values [2*B, 64], rows ordered (j3, b).
    y3_rows = []
    for i3 in range(2):
        acc = None
        for kh in range(2):
            src = y2_rows[i3 + kh]
            for kw in range(2):
                lhs = src[kw * B:(kw + 2) * B, :]                   # [2B, 64]
                t = kh * 2 + kw
                prod = jnp.dot(lhs, w_ref[o3 + t * 64:o3 + (t + 1) * 64, 0:64],
                               preferred_element_type=f32)
                acc = prod if acc is None else acc + prod
        y3_rows.append(jnp.maximum(acc + b3, 0.0))

    # ---- fc4 + ReLU (w4 rows pre-permuted to (pixel, channel) order) --------
    h4 = None
    for i3 in range(2):
        for j3 in range(2):
            p = i3 * 2 + j3                    # torch NCHW-flatten pixel index
            lhs = y3_rows[i3][j3 * B:(j3 + 1) * B, :]               # [B, 64]
            prod = jnp.dot(lhs, w_ref[o4 + p * 64:o4 + (p + 1) * 64, :],
                           preferred_element_type=f32)
            h4 = prod if h4 is None else h4 + prod
    h4 = jnp.maximum(h4 + b4, 0.0)                                  # [B, 128]

    # ---- fused fc5 (softmax) + fc6 (value): lane-dense [B, 128] output ------
    z = jnp.dot(h4, w_ref[o5:o5 + 128, :], preferred_element_type=f32) + b56
    col = jax.lax.broadcasted_iota(jnp.int32, z.shape, 1)
    is_act = col < num_action
    m = jnp.max(jnp.where(is_act, z, -1e30), axis=1, keepdims=True)
    e = jnp.where(is_act, jnp.exp(z - m), 0.0)
    denom = jnp.sum(e, axis=1, keepdims=True)
    pi = e / denom                              # exact: rows sum to 1
    # cols [0, A): softmax probs; col A: value; cols > A: explicit zeros.
    out_ref[...] = jnp.where(is_act, pi,
                             jnp.where(col == num_action, z, 0.0))


# ---------------------------------------------------------------------------
# One-time weight re-layout (done once, outside the per-step path)
# ---------------------------------------------------------------------------
def prepare_params(params, num_action):
    assert num_action + 1 <= _LANE

    def conv_w2d(w):                            # OIHW -> [(kh, kw, cin), cout]
        co, ci, kh, kw = w.shape
        return jnp.transpose(w, (2, 3, 1, 0)).reshape(kh * kw * ci, co)

    cin = params["conv1_w"].shape[1]
    o1, o2, o3, o4, o5, total = _slab_layout(cin)
    a = num_action

    # fc4 consumes torch's NCHW flatten (feature = c*4 + p); the kernel feeds
    # it per-pixel (p, c) blocks, so permute fc4's input rows to (p, c).
    w4t = params["fc4_w"].T                                     # [256,128], row=c*4+p
    w4 = jnp.transpose(w4t.reshape(64, 4, -1), (1, 0, 2)).reshape(256, -1)

    w = jnp.zeros((total, _LANE), jnp.float32)
    w = w.at[o1:o1 + 9 * cin, 0:32].set(conv_w2d(params["conv1_w"]))
    w = w.at[o2:o2 + 128, 0:64].set(conv_w2d(params["conv2_w"]))
    w = w.at[o3:o3 + 256, 0:64].set(conv_w2d(params["conv3_w"]))
    w = w.at[o4:o4 + 256, 0:128].set(w4)
    w = w.at[o5:o5 + 128, 0:a].set(params["fc5_w"].T)
    w = w.at[o5:o5 + 128, a:a + 1].set(params["fc6_w"].T)

    b = jnp.zeros((8, _LANE), jnp.float32)
    b = b.at[0, 0:32].set(params["conv1_b"])
    b = b.at[1, 0:64].set(params["conv2_b"])
    b = b.at[2, 0:64].set(params["conv3_b"])
    b = b.at[3, 0:128].set(params["fc4_b"])
    b = b.at[4, 0:a].set(params["fc5_b"])
    b = b.at[4, a].set(params["fc6_b"][0])

    return {"w": w, "b": b}


# ---------------------------------------------------------------------------
# Forward (ActorCritic.action_and_value)
# ---------------------------------------------------------------------------
def action_and_value(kparams, state_nchw, *, num_action):
    B, C, H, W = state_nchw.shape
    assert H == 8 and W == 8, "fc4(256) implies an 8x8 input"

    # conv1 im2col as one small XLA gather (k=3, stride=2, pad=1 -> 4x4):
    # rows ordered (p1, b), columns ordered (kh, kw, cin).
    xpad = jnp.pad(state_nchw, ((0, 0), (0, 0), (1, 1), (1, 1)))   # [B,C,10,10]
    patches = [xpad[:, :, kh:kh + 8:2, kw:kw + 8:2]
               for kh in range(3) for kw in range(3)]              # 9 x [B,C,4,4]
    cols1 = jnp.transpose(jnp.stack(patches, axis=0),
                          (3, 4, 1, 0, 2)).reshape(16 * B, 9 * C)

    def full(shape):
        return pl.BlockSpec(shape, lambda: (0,) * len(shape))

    out = pl.pallas_call(
        functools.partial(_fused_forward_kernel, batch=B, cin=C,
                          num_action=num_action),
        out_shape=jax.ShapeDtypeStruct((B, _LANE), jnp.float32),
        in_specs=[full(cols1.shape), full(kparams["w"].shape),
                  full(kparams["b"].shape)],
        out_specs=full((B, _LANE)),
    )(cols1, kparams["w"], kparams["b"])

    pi = out[:, :num_action]
    value = out[:, num_action:num_action + 1]
    return pi, value


# ---------------------------------------------------------------------------
# Params, pure-JAX reference, test
# ---------------------------------------------------------------------------
def init_params(key, state_dim, num_action):
    ks = jax.random.split(key, 12)
    s = 0.05
    return {
        "conv1_w": jax.random.normal(ks[0], (32, state_dim, 3, 3), jnp.float32) * s,
        "conv1_b": jax.random.normal(ks[1], (32,), jnp.float32) * s,
        "conv2_w": jax.random.normal(ks[2], (64, 32, 2, 2), jnp.float32) * s,
        "conv2_b": jax.random.normal(ks[3], (64,), jnp.float32) * s,
        "conv3_w": jax.random.normal(ks[4], (64, 64, 2, 2), jnp.float32) * s,
        "conv3_b": jax.random.normal(ks[5], (64,), jnp.float32) * s,
        "fc4_w": jax.random.normal(ks[6], (128, 256), jnp.float32) * s,
        "fc4_b": jax.random.normal(ks[7], (128,), jnp.float32) * s,
        "fc5_w": jax.random.normal(ks[8], (num_action, 128), jnp.float32) * s,
        "fc5_b": jax.random.normal(ks[9], (num_action,), jnp.float32) * s,
        "fc6_w": jax.random.normal(ks[10], (1, 128), jnp.float32) * s,
        "fc6_b": jax.random.normal(ks[11], (1,), jnp.float32) * s,
    }


def _reference(params, state):
    dn = ("NCHW", "OIHW", "NCHW")

    def conv(x, w, b, stride, pad):
        y = jax.lax.conv_general_dilated(
            x, w, (stride, stride), [(pad, pad), (pad, pad)],
            dimension_numbers=dn)
        return jax.nn.relu(y + b.reshape(1, -1, 1, 1))

    h = conv(state, params["conv1_w"], params["conv1_b"], 2, 1)
    h = conv(h, params["conv2_w"], params["conv2_b"], 1, 0)
    h = conv(h, params["conv3_w"], params["conv3_b"], 1, 0)
    h = h.reshape(h.shape[0], -1)
    h = jax.nn.relu(h @ params["fc4_w"].T + params["fc4_b"])
    pi = jax.nn.softmax(h @ params["fc5_w"].T + params["fc5_b"], axis=1)
    v = h @ params["fc6_w"].T + params["fc6_b"]
    return pi, v


if __name__ == "__main__":
    B, state_dim, H, W = 2, 4, 8, 8          # 8x8 -> 4x4 -> 3x3 -> 2x2 (=256 flat)
    num_action = 6

    key = jax.random.PRNGKey(0)
    pkey, xkey = jax.random.split(key)
    params = init_params(pkey, state_dim, num_action)
    state = jax.random.normal(xkey, (B, state_dim, H, W), jnp.float32)

    kparams = prepare_params(params, num_action)      # one-time weight layout
    fwd = jax.jit(functools.partial(action_and_value, num_action=num_action))

    pi, value = fwd(kparams, state)
    jax.block_until_ready((pi, value))

    pi_ref, v_ref = _reference(params, state)
    np.testing.assert_allclose(np.asarray(pi), np.asarray(pi_ref),
                               rtol=1e-2, atol=1e-3)
    np.testing.assert_allclose(np.asarray(value), np.asarray(v_ref),
                               rtol=1e-3, atol=1e-4)
    # Exact softmax reciprocal: probability rows sum to 1.
    np.testing.assert_allclose(np.asarray(pi).sum(axis=1), np.ones((B,)),
                               rtol=0, atol=1e-5)
    assert pi.shape == (B, num_action) and value.shape == (B, 1)

    print("KERNEL_OK")
</pallas_src>

<mosaic_0001>
module attributes {stable_mosaic.version = 11 : i64} {
  func.func @_fused_forward_kernel(%arg0: memref<32x36xf32, #tpu.memory_space<vmem>>, %arg1: memref<808x128xf32, #tpu.memory_space<vmem>>, %arg2: memref<8x128xf32, #tpu.memory_space<vmem>>, %arg3: memref<2x128xf32, #tpu.memory_space<vmem>>) attributes {dimension_semantics = [], scalar_prefetch = 0 : i64, scratch_operands = 0 : i64, tpu.core_type = #tpu.core_type<tc>} {
    %c0 = arith.constant 0 : index
    %c0_0 = arith.constant 0 : index
    %0 = vector.load %arg2[%c0, %c0_0] : memref<8x128xf32, #tpu.memory_space<vmem>>, vector<1x32xf32>
    %c1 = arith.constant 1 : index
    %c0_1 = arith.constant 0 : index
    %1 = vector.load %arg2[%c1, %c0_1] : memref<8x128xf32, #tpu.memory_space<vmem>>, vector<1x64xf32>
    %c2 = arith.constant 2 : index
    %c0_2 = arith.constant 0 : index
    %2 = vector.load %arg2[%c2, %c0_2] : memref<8x128xf32, #tpu.memory_space<vmem>>, vector<1x64xf32>
    %c3 = arith.constant 3 : index
    %c0_3 = arith.constant 0 : index
    %3 = vector.load %arg2[%c3, %c0_3] : memref<8x128xf32, #tpu.memory_space<vmem>>, vector<1x128xf32>
    %c4 = arith.constant 4 : index
    %c0_4 = arith.constant 0 : index
    %4 = vector.load %arg2[%c4, %c0_4] : memref<8x128xf32, #tpu.memory_space<vmem>>, vector<1x128xf32>
    %c0_5 = arith.constant 0 : index
    %c0_6 = arith.constant 0 : index
    %5 = vector.load %arg0[%c0_5, %c0_6] : memref<32x36xf32, #tpu.memory_space<vmem>>, vector<32x36xf32>
    %c0_7 = arith.constant 0 : index
    %c0_8 = arith.constant 0 : index
    %6 = vector.load %arg1[%c0_7, %c0_8] : memref<808x128xf32, #tpu.memory_space<vmem>>, vector<36x32xf32>
    %cst = arith.constant dense<0.000000e+00> : vector<32x32xf32>
    %7 = tpu.matmul %5, %6, %cst {dimension_numbers = #tpu.dot_dimension_numbers<[1], [0], [0], [1], [0, 0, 1, 1], [], []>} : vector<32x36xf32>, vector<36x32xf32>, vector<32x32xf32> -> vector<32x32xf32>
    %8 = vector.broadcast %0 : vector<1x32xf32> to vector<32x32xf32>
    %9 = arith.addf %7, %8 : vector<32x32xf32>
    %cst_9 = arith.constant 0.000000e+00 : f32
    %10 = vector.broadcast %cst_9 : f32 to vector<32x32xf32>
    %11 = arith.maximumf %9, %10 : vector<32x32xf32>
    %12 = vector.extract_strided_slice %11 {offsets = [0, 0], sizes = [6, 32], strides = [1, 1]} : vector<32x32xf32> to vector<6x32xf32>
    %c40 = arith.constant 40 : index
    %c0_10 = arith.constant 0 : index
    %13 = vector.load %arg1[%c40, %c0_10] : memref<808x128xf32, #tpu.memory_space<vmem>>, vector<32x64xf32>
    %cst_11 = arith.constant dense<0.000000e+00> : vector<6x64xf32>
    %14 = tpu.matmul %12, %13, %cst_11 {dimension_numbers = #tpu.dot_dimension_numbers<[1], [0], [0], [1], [0, 0, 1, 1], [], []>} : vector<6x32xf32>, vector<32x64xf32>, vector<6x64xf32> -> vector<6x64xf32>
    %15 = vector.extract_strided_slice %11 {offsets = [2, 0], sizes = [6, 32], strides = [1, 1]} : vector<32x32xf32> to vector<6x32xf32>
    %c72 = arith.constant 72 : index
    %c0_12 = arith.constant 0 : index
    %16 = vector.load %arg1[%c72, %c0_12] : memref<808x128xf32, #tpu.memory_space<vmem>>, vector<32x64xf32>
    %cst_13 = arith.constant dense<0.000000e+00> : vector<6x64xf32>
    %17 = tpu.matmul %15, %16, %cst_13 {dimension_numbers = #tpu.dot_dimension_numbers<[1], [0], [0], [1], [0, 0, 1, 1], [], []>} : vector<6x32xf32>, vector<32x64xf32>, vector<6x64xf32> -> vector<6x64xf32>
    %18 = arith.addf %14, %17 : vector<6x64xf32>
    %19 = vector.extract_strided_slice %11 {offsets = [8, 0], sizes = [6, 32], strides = [1, 1]} : vector<32x32xf32> to vector<6x32xf32>
    %c104 = arith.constant 104 : index
    %c0_14 = arith.constant 0 : index
    %20 = vector.load %arg1[%c104, %c0_14] : memref<808x128xf32, #tpu.memory_space<vmem>>, vector<32x64xf32>
    %cst_15 = arith.constant dense<0.000000e+00> : vector<6x64xf32>
    %21 = tpu.matmul %19, %20, %cst_15 {dimension_numbers = #tpu.dot_dimension_numbers<[1], [0], [0], [1], [0, 0, 1, 1], [], []>} : vector<6x32xf32>, vector<32x64xf32>, vector<6x64xf32> -> vector<6x64xf32>
    %22 = arith.addf %18, %21 : vector<6x64xf32>
    %23 = vector.extract_strided_slice %11 {offsets = [10, 0], sizes = [6, 32], strides = [1, 1]} : vector<32x32xf32> to vector<6x32xf32>
    %c136 = arith.constant 136 : index
    %c0_16 = arith.constant 0 : index
    %24 = vector.load %arg1[%c136, %c0_16] : memref<808x128xf32, #tpu.memory_space<vmem>>, vector<32x64xf32>
    %cst_17 = arith.constant dense<0.000000e+00> : vector<6x64xf32>
    %25 = tpu.matmul %23, %24, %cst_17 {dimension_numbers = #tpu.dot_dimension_numbers<[1], [0], [0], [1], [0, 0, 1, 1], [], []>} : vector<6x32xf32>, vector<32x64xf32>, vector<6x64xf32> -> vector<6x64xf32>
    %26 = arith.addf %22, %25 : vector<6x64xf32>
    %27 = vector.broadcast %1 : vector<1x64xf32> to vector<6x64xf32>
    %28 = arith.addf %26, %27 : vector<6x64xf32>
    %cst_18 = arith.constant 0.000000e+00 : f32
    %29 = vector.broadcast %cst_18 : f32 to vector<6x64xf32>
    %30 = arith.maximumf %28, %29 : vector<6x64xf32>
    %31 = vector.extract_strided_slice %11 {offsets = [8, 0], sizes = [6, 32], strides = [1, 1]} : vector<32x32xf32> to vector<6x32xf32>
    %c40_19 = arith.constant 40 : index
    %c0_20 = arith.constant 0 : index
    %32 = vector.load %arg1[%c40_19, %c0_20] : memref<808x128xf32, #tpu.memory_space<vmem>>, vector<32x64xf32>
    %cst_21 = arith.constant dense<0.000000e+00> : vector<6x64xf32>
    %33 = tpu.matmul %31, %32, %cst_21 {dimension_numbers = #tpu.dot_dimension_numbers<[1], [0], [0], [1], [0, 0, 1, 1], [], []>} : vector<6x32xf32>, vector<32x64xf32>, vector<6x64xf32> -> vector<6x64xf32>
    %34 = vector.extract_strided_slice %11 {offsets = [10, 0], sizes = [6, 32], strides = [1, 1]} : vector<32x32xf32> to vector<6x32xf32>
    %c72_22 = arith.constant 72 : index
    %c0_23 = arith.constant 0 : index
    %35 = vector.load %arg1[%c72_22, %c0_23] : memref<808x128xf32, #tpu.memory_space<vmem>>, vector<32x64xf32>
    %cst_24 = arith.constant dense<0.000000e+00> : vector<6x64xf32>
    %36 = tpu.matmul %34, %35, %cst_24 {dimension_numbers = #tpu.dot_dimension_numbers<[1], [0], [0], [1], [0, 0, 1, 1], [], []>} : vector<6x32xf32>, vector<32x64xf32>, vector<6x64xf32> -> vector<6x64xf32>
    %37 = arith.addf %33, %36 : vector<6x64xf32>
    %38 = vector.extract_strided_slice %11 {offsets = [16, 0], sizes = [6, 32], strides = [1, 1]} : vector<32x32xf32> to vector<6x32xf32>
    %c104_25 = arith.constant 104 : index
    %c0_26 = arith.constant 0 : index
    %39 = vector.load %arg1[%c104_25, %c0_26] : memref<808x128xf32, #tpu.memory_space<vmem>>, vector<32x64xf32>
    %cst_27 = arith.constant dense<0.000000e+00> : vector<6x64xf32>
    %40 = tpu.matmul %38, %39, %cst_27 {dimension_numbers = #tpu.dot_dimension_numbers<[1], [0], [0], [1], [0, 0, 1, 1], [], []>} : vector<6x32xf32>, vector<32x64xf32>, vector<6x64xf32> -> vector<6x64xf32>
    %41 = arith.addf %37, %40 : vector<6x64xf32>
    %42 = vector.extract_strided_slice %11 {offsets = [18, 0], sizes = [6, 32], strides = [1, 1]} : vector<32x32xf32> to vector<6x32xf32>
    %c136_28 = arith.constant 136 : index
    %c0_29 = arith.constant 0 : index
    %43 = vector.load %arg1[%c136_28, %c0_29] : memref<808x128xf32, #tpu.memory_space<vmem>>, vector<32x64xf32>
    %cst_30 = arith.constant dense<0.000000e+00> : vector<6x64xf32>
    %44 = tpu.matmul %42, %43, %cst_30 {dimension_numbers = #tpu.dot_dimension_numbers<[1], [0], [0], [1], [0, 0, 1, 1], [], []>} : vector<6x32xf32>, vector<32x64xf32>, vector<6x64xf32> -> vector<6x64xf32>
    %45 = arith.addf %41, %44 : vector<6x64xf32>
    %46 = vector.broadcast %1 : vector<1x64xf32> to vector<6x64xf32>
    %47 = arith.addf %45, %46 : vector<6x64xf32>
    %cst_31 = arith.constant 0.000000e+00 : f32
    %48 = vector.broadcast %cst_31 : f32 to vector<6x64xf32>
    %49 = arith.maximumf %47, %48 : vector<6x64xf32>
    %50 = vector.extract_strided_slice %11 {offsets = [16, 0], sizes = [6, 32], strides = [1, 1]} : vector<32x32xf32> to vector<6x32xf32>
    %c40_32 = arith.constant 40 : index
    %c0_33 = arith.constant 0 : index
    %51 = vector.load %arg1[%c40_32, %c0_33] : memref<808x128xf32, #tpu.memory_space<vmem>>, vector<32x64xf32>
    %cst_34 = arith.constant dense<0.000000e+00> : vector<6x64xf32>
    %52 = tpu.matmul %50, %51, %cst_34 {dimension_numbers = #tpu.dot_dimension_numbers<[1], [0], [0], [1], [0, 0, 1, 1], [], []>} : vector<6x32xf32>, vector<32x64xf32>, vector<6x64xf32> -> vector<6x64xf32>
    %53 = vector.extract_strided_slice %11 {offsets = [18, 0], sizes = [6, 32], strides = [1, 1]} : vector<32x32xf32> to vector<6x32xf32>
    %c72_35 = arith.constant 72 : index
    %c0_36 = arith.constant 0 : index
    %54 = vector.load %arg1[%c72_35, %c0_36] : memref<808x128xf32, #tpu.memory_space<vmem>>, vector<32x64xf32>
    %cst_37 = arith.constant dense<0.000000e+00> : vector<6x64xf32>
    %55 = tpu.matmul %53, %54, %cst_37 {dimension_numbers = #tpu.dot_dimension_numbers<[1], [0], [0], [1], [0, 0, 1, 1], [], []>} : vector<6x32xf32>, vector<32x64xf32>, vector<6x64xf32> -> vector<6x64xf32>
    %56 = arith.addf %52, %55 : vector<6x64xf32>
    %57 = vector.extract_strided_slice %11 {offsets = [24, 0], sizes = [6, 32], strides = [1, 1]} : vector<32x32xf32> to vector<6x32xf32>
    %c104_38 = arith.constant 104 : index
    %c0_39 = arith.constant 0 : index
    %58 = vector.load %arg1[%c104_38, %c0_39] : memref<808x128xf32, #tpu.memory_space<vmem>>, vector<32x64xf32>
    %cst_40 = arith.constant dense<0.000000e+00> : vector<6x64xf32>
    %59 = tpu.matmul %57, %58, %cst_40 {dimension_numbers = #tpu.dot_dimension_numbers<[1], [0], [0], [1], [0, 0, 1, 1], [], []>} : vector<6x32xf32>, vector<32x64xf32>, vector<6x64xf32> -> vector<6x64xf32>
    %60 = arith.addf %56, %59 : vector<6x64xf32>
    %61 = vector.extract_strided_slice %11 {offsets = [26, 0], sizes = [6, 32], strides = [1, 1]} : vector<32x32xf32> to vector<6x32xf32>
    %c136_41 = arith.constant 136 : index
    %c0_42 = arith.constant 0 : index
    %62 = vector.load %arg1[%c136_41, %c0_42] : memref<808x128xf32, #tpu.memory_space<vmem>>, vector<32x64xf32>
    %cst_43 = arith.constant dense<0.000000e+00> : vector<6x64xf32>
    %63 = tpu.matmul %61, %62, %cst_43 {dimension_numbers = #tpu.dot_dimension_numbers<[1], [0], [0], [1], [0, 0, 1, 1], [], []>} : vector<6x32xf32>, vector<32x64xf32>, vector<6x64xf32> -> vector<6x64xf32>
    %64 = arith.addf %60, %63 : vector<6x64xf32>
    %65 = vector.broadcast %1 : vector<1x64xf32> to vector<6x64xf32>
    %66 = arith.addf %64, %65 : vector<6x64xf32>
    %cst_44 = arith.constant 0.000000e+00 : f32
    %67 = vector.broadcast %cst_44 : f32 to vector<6x64xf32>
    %68 = arith.maximumf %66, %67 : vector<6x64xf32>
    %69 = vector.extract_strided_slice %30 {offsets = [0, 0], sizes = [4, 64], strides = [1, 1]} : vector<6x64xf32> to vector<4x64xf32>
    %c168 = arith.constant 168 : index
    %c0_45 = arith.constant 0 : index
    %70 = vector.load %arg1[%c168, %c0_45] : memref<808x128xf32, #tpu.memory_space<vmem>>, vector<64x64xf32>
    %cst_46 = arith.constant dense<0.000000e+00> : vector<4x64xf32>
    %71 = tpu.matmul %69, %70, %cst_46 {dimension_numbers = #tpu.dot_dimension_numbers<[1], [0], [0], [1], [0, 0, 1, 1], [], []>} : vector<4x64xf32>, vector<64x64xf32>, vector<4x64xf32> -> vector<4x64xf32>
    %72 = vector.extract_strided_slice %30 {offsets = [2, 0], sizes = [4, 64], strides = [1, 1]} : vector<6x64xf32> to vector<4x64xf32>
    %c232 = arith.constant 232 : index
    %c0_47 = arith.constant 0 : index
    %73 = vector.load %arg1[%c232, %c0_47] : memref<808x128xf32, #tpu.memory_space<vmem>>, vector<64x64xf32>
    %cst_48 = arith.constant dense<0.000000e+00> : vector<4x64xf32>
    %74 = tpu.matmul %72, %73, %cst_48 {dimension_numbers = #tpu.dot_dimension_numbers<[1], [0], [0], [1], [0, 0, 1, 1], [], []>} : vector<4x64xf32>, vector<64x64xf32>, vector<4x64xf32> -> vector<4x64xf32>
    %75 = arith.addf %71, %74 : vector<4x64xf32>
    %76 = vector.extract_strided_slice %49 {offsets = [0, 0], sizes = [4, 64], strides = [1, 1]} : vector<6x64xf32> to vector<4x64xf32>
    %c296 = arith.constant 296 : index
    %c0_49 = arith.constant 0 : index
    %77 = vector.load %arg1[%c296, %c0_49] : memref<808x128xf32, #tpu.memory_space<vmem>>, vector<64x64xf32>
    %cst_50 = arith.constant dense<0.000000e+00> : vector<4x64xf32>
    %78 = tpu.matmul %76, %77, %cst_50 {dimension_numbers = #tpu.dot_dimension_numbers<[1], [0], [0], [1], [0, 0, 1, 1], [], []>} : vector<4x64xf32>, vector<64x64xf32>, vector<4x64xf32> -> vector<4x64xf32>
    %79 = arith.addf %75, %78 : vector<4x64xf32>
    %80 = vector.extract_strided_slice %49 {offsets = [2, 0], sizes = [4, 64], strides = [1, 1]} : vector<6x64xf32> to vector<4x64xf32>
    %c360 = arith.constant 360 : index
    %c0_51 = arith.constant 0 : index
    %81 = vector.load %arg1[%c360, %c0_51] : memref<808x128xf32, #tpu.memory_space<vmem>>, vector<64x64xf32>
    %cst_52 = arith.constant dense<0.000000e+00> : vector<4x64xf32>
    %82 = tpu.matmul %80, %81, %cst_52 {dimension_numbers = #tpu.dot_dimension_numbers<[1], [0], [0], [1], [0, 0, 1, 1], [], []>} : vector<4x64xf32>, vector<64x64xf32>, vector<4x64xf32> -> vector<4x64xf32>
    %83 = arith.addf %79, %82 : vector<4x64xf32>
    %84 = vector.broadcast %2 : vector<1x64xf32> to vector<4x64xf32>
    %85 = arith.addf %83, %84 : vector<4x64xf32>
    %cst_53 = arith.constant 0.000000e+00 : f32
    %86 = vector.broadcast %cst_53 : f32 to vector<4x64xf32>
    %87 = arith.maximumf %85, %86 : vector<4x64xf32>
    %88 = vector.extract_strided_slice %49 {offsets = [0, 0], sizes = [4, 64], strides = [1, 1]} : vector<6x64xf32> to vector<4x64xf32>
    %c168_54 = arith.constant 168 : index
    %c0_55 = arith.constant 0 : index
    %89 = vector.load %arg1[%c168_54, %c0_55] : memref<808x128xf32, #tpu.memory_space<vmem>>, vector<64x64xf32>
    %cst_56 = arith.constant dense<0.000000e+00> : vector<4x64xf32>
    %90 = tpu.matmul %88, %89, %cst_56 {dimension_numbers = #tpu.dot_dimension_numbers<[1], [0], [0], [1], [0, 0, 1, 1], [], []>} : vector<4x64xf32>, vector<64x64xf32>, vector<4x64xf32> -> vector<4x64xf32>
    %91 = vector.extract_strided_slice %49 {offsets = [2, 0], sizes = [4, 64], strides = [1, 1]} : vector<6x64xf32> to vector<4x64xf32>
    %c232_57 = arith.constant 232 : index
    %c0_58 = arith.constant 0 : index
    %92 = vector.load %arg1[%c232_57, %c0_58] : memref<808x128xf32, #tpu.memory_space<vmem>>, vector<64x64xf32>
    %cst_59 = arith.constant dense<0.000000e+00> : vector<4x64xf32>
    %93 = tpu.matmul %91, %92, %cst_59 {dimension_numbers = #tpu.dot_dimension_numbers<[1], [0], [0], [1], [0, 0, 1, 1], [], []>} : vector<4x64xf32>, vector<64x64xf32>, vector<4x64xf32> -> vector<4x64xf32>
    %94 = arith.addf %90, %93 : vector<4x64xf32>
    %95 = vector.extract_strided_slice %68 {offsets = [0, 0], sizes = [4, 64], strides = [1, 1]} : vector<6x64xf32> to vector<4x64xf32>
    %c296_60 = arith.constant 296 : index
    %c0_61 = arith.constant 0 : index
    %96 = vector.load %arg1[%c296_60, %c0_61] : memref<808x128xf32, #tpu.memory_space<vmem>>, vector<64x64xf32>
    %cst_62 = arith.constant dense<0.000000e+00> : vector<4x64xf32>
    %97 = tpu.matmul %95, %96, %cst_62 {dimension_numbers = #tpu.dot_dimension_numbers<[1], [0], [0], [1], [0, 0, 1, 1], [], []>} : vector<4x64xf32>, vector<64x64xf32>, vector<4x64xf32> -> vector<4x64xf32>
    %98 = arith.addf %94, %97 : vector<4x64xf32>
    %99 = vector.extract_strided_slice %68 {offsets = [2, 0], sizes = [4, 64], strides = [1, 1]} : vector<6x64xf32> to vector<4x64xf32>
    %c360_63 = arith.constant 360 : index
    %c0_64 = arith.constant 0 : index
    %100 = vector.load %arg1[%c360_63, %c0_64] : memref<808x128xf32, #tpu.memory_space<vmem>>, vector<64x64xf32>
    %cst_65 = arith.constant dense<0.000000e+00> : vector<4x64xf32>
    %101 = tpu.matmul %99, %100, %cst_65 {dimension_numbers = #tpu.dot_dimension_numbers<[1], [0], [0], [1], [0, 0, 1, 1], [], []>} : vector<4x64xf32>, vector<64x64xf32>, vector<4x64xf32> -> vector<4x64xf32>
    %102 = arith.addf %98, %101 : vector<4x64xf32>
    %103 = vector.broadcast %2 : vector<1x64xf32> to vector<4x64xf32>
    %104 = arith.addf %102, %103 : vector<4x64xf32>
    %cst_66 = arith.constant 0.000000e+00 : f32
    %105 = vector.broadcast %cst_66 : f32 to vector<4x64xf32>
    %106 = arith.maximumf %104, %105 : vector<4x64xf32>
    %107 = vector.extract_strided_slice %87 {offsets = [0, 0], sizes = [2, 64], strides = [1, 1]} : vector<4x64xf32> to vector<2x64xf32>
    %c424 = arith.constant 424 : index
    %c0_67 = arith.constant 0 : index
    %108 = vector.load %arg1[%c424, %c0_67] : memref<808x128xf32, #tpu.memory_space<vmem>>, vector<64x128xf32>
    %cst_68 = arith.constant dense<0.000000e+00> : vector<2x128xf32>
    %109 = tpu.matmul %107, %108, %cst_68 {dimension_numbers = #tpu.dot_dimension_numbers<[1], [0], [0], [1], [0, 0, 1, 1], [], []>} : vector<2x64xf32>, vector<64x128xf32>, vector<2x128xf32> -> vector<2x128xf32>
    %110 = vector.extract_strided_slice %87 {offsets = [2, 0], sizes = [2, 64], strides = [1, 1]} : vector<4x64xf32> to vector<2x64xf32>
    %c488 = arith.constant 488 : index
    %c0_69 = arith.constant 0 : index
    %111 = vector.load %arg1[%c488, %c0_69] : memref<808x128xf32, #tpu.memory_space<vmem>>, vector<64x128xf32>
    %cst_70 = arith.constant dense<0.000000e+00> : vector<2x128xf32>
    %112 = tpu.matmul %110, %111, %cst_70 {dimension_numbers = #tpu.dot_dimension_numbers<[1], [0], [0], [1], [0, 0, 1, 1], [], []>} : vector<2x64xf32>, vector<64x128xf32>, vector<2x128xf32> -> vector<2x128xf32>
    %113 = arith.addf %109, %112 : vector<2x128xf32>
    %114 = vector.extract_strided_slice %106 {offsets = [0, 0], sizes = [2, 64], strides = [1, 1]} : vector<4x64xf32> to vector<2x64xf32>
    %c552 = arith.constant 552 : index
    %c0_71 = arith.constant 0 : index
    %115 = vector.load %arg1[%c552, %c0_71] : memref<808x128xf32, #tpu.memory_space<vmem>>, vector<64x128xf32>
    %cst_72 = arith.constant dense<0.000000e+00> : vector<2x128xf32>
    %116 = tpu.matmul %114, %115, %cst_72 {dimension_numbers = #tpu.dot_dimension_numbers<[1], [0], [0], [1], [0, 0, 1, 1], [], []>} : vector<2x64xf32>, vector<64x128xf32>, vector<2x128xf32> -> vector<2x128xf32>
    %117 = arith.addf %113, %116 : vector<2x128xf32>
    %118 = vector.extract_strided_slice %106 {offsets = [2, 0], sizes = [2, 64], strides = [1, 1]} : vector<4x64xf32> to vector<2x64xf32>
    %c616 = arith.constant 616 : index
    %c0_73 = arith.constant 0 : index
    %119 = vector.load %arg1[%c616, %c0_73] : memref<808x128xf32, #tpu.memory_space<vmem>>, vector<64x128xf32>
    %cst_74 = arith.constant dense<0.000000e+00> : vector<2x128xf32>
    %120 = tpu.matmul %118, %119, %cst_74 {dimension_numbers = #tpu.dot_dimension_numbers<[1], [0], [0], [1], [0, 0, 1, 1], [], []>} : vector<2x64xf32>, vector<64x128xf32>, vector<2x128xf32> -> vector<2x128xf32>
    %121 = arith.addf %117, %120 : vector<2x128xf32>
    %122 = vector.broadcast %3 : vector<1x128xf32> to vector<2x128xf32>
    %123 = arith.addf %121, %122 : vector<2x128xf32>
    %cst_75 = arith.constant 0.000000e+00 : f32
    %124 = vector.broadcast %cst_75 : f32 to vector<2x128xf32>
    %125 = arith.maximumf %123, %124 : vector<2x128xf32>
    %c680 = arith.constant 680 : index
    %c0_76 = arith.constant 0 : index
    %126 = vector.load %arg1[%c680, %c0_76] : memref<808x128xf32, #tpu.memory_space<vmem>>, vector<128x128xf32>
    %cst_77 = arith.constant dense<0.000000e+00> : vector<2x128xf32>
    %127 = tpu.matmul %125, %126, %cst_77 {dimension_numbers = #tpu.dot_dimension_numbers<[1], [0], [0], [1], [0, 0, 1, 1], [], []>} : vector<2x128xf32>, vector<128x128xf32>, vector<2x128xf32> -> vector<2x128xf32>
    %128 = vector.broadcast %4 : vector<1x128xf32> to vector<2x128xf32>
    %129 = arith.addf %127, %128 : vector<2x128xf32>
    %130 = tpu.iota {dimensions = array<i32: 1>} : vector<2x128xi32>
    %c6_i32 = arith.constant 6 : i32
    %131 = vector.broadcast %c6_i32 : i32 to vector<2x128xi32>
    %132 = arith.cmpi slt, %130, %131 : vector<2x128xi32>
    %cst_78 = arith.constant -1.000000e+30 : f32
    %133 = vector.broadcast %cst_78 : f32 to vector<2x128xf32>
    %134 = arith.select %132, %129, %133 : vector<2x128xi1>, vector<2x128xf32>
    %cst_79 = arith.constant dense<0xFF800000> : vector<2xf32>
    %135 = vector.multi_reduction <maximumf>, %134, %cst_79 [1] : vector<2x128xf32> to vector<2xf32>
    %136 = vector.shape_cast %135 : vector<2xf32> to vector<2x1xf32>
    %137 = vector.broadcast %136 : vector<2x1xf32> to vector<2x128xf32>
    %138 = arith.subf %129, %137 : vector<2x128xf32>
    %139 = math.exp %138 : vector<2x128xf32>
    %cst_80 = arith.constant 0.000000e+00 : f32
    %140 = vector.broadcast %cst_80 : f32 to vector<2x128xf32>
    %141 = arith.select %132, %139, %140 : vector<2x128xi1>, vector<2x128xf32>
    %cst_81 = arith.constant dense<0.000000e+00> : vector<2xf32>
    %142 = vector.multi_reduction <add>, %141, %cst_81 [1] : vector<2x128xf32> to vector<2xf32>
    %143 = vector.shape_cast %142 : vector<2xf32> to vector<2x1xf32>
    %144 = vector.broadcast %143 : vector<2x1xf32> to vector<2x128xf32>
    %145 = arith.divf %141, %144 : vector<2x128xf32>
    %c6_i32_82 = arith.constant 6 : i32
    %146 = vector.broadcast %c6_i32_82 : i32 to vector<2x128xi32>
    %147 = arith.cmpi eq, %130, %146 : vector<2x128xi32>
    %cst_83 = arith.constant 0.000000e+00 : f32
    %148 = vector.broadcast %cst_83 : f32 to vector<2x128xf32>
    %149 = arith.select %147, %129, %148 : vector<2x128xi1>, vector<2x128xf32>
    %150 = arith.select %132, %145, %149 : vector<2x128xi1>, vector<2x128xf32>
    %c0_84 = arith.constant 0 : index
    %c0_85 = arith.constant 0 : index
    %151 = vector.load %arg3[%c0_84, %c0_85] : memref<2x128xf32, #tpu.memory_space<vmem>>, vector<2x128xf32>
    tpu.vector_store %arg3[%c0_84, %c0_85], %150 {strides = array<i32>} : memref<2x128xf32, #tpu.memory_space<vmem>>, vector<2x128xf32>,
    return
  }
}

</mosaic_0001>

<llo_original>
// kernel: action_and_value.1
$region0: #{action_and_value.1}
  #allocation0 [shape = 'u32[]', space=smem, size = 0x4, offset = 0x4, fixed_abs, tag = 'smem constant byte address 0x4 - core index']
  #allocation1 [shape = 'u32[144,128]{1,0:T(1,128)}', space=vmem, size = 0x12000, scoped, tag = 'internal scratch']
  %s0 = inlined_call_operand.vmem [shape: f32[32,36], index: 0, kind: input, shape index: {}]
  %s1 = inlined_call_operand.vmem [shape: f32[808,128], index: 1, kind: input, shape index: {}]
  %s2 = inlined_call_operand.vmem [shape: f32[8,128], index: 2, kind: input, shape index: {}]
  %s3 = inlined_call_operand.vmem [shape: f32[2,128], index: 3, kind: output, shape index: {}]
  %s4 = sld [smem:[#allocation0]]
  $region22: #{action_and_value.1} parent=0
    _
  %s6 = ssub.s32 1, %s4
  %s7 = scalar_select 0, %s6, %s4
  // Predicated region
  $region2: #{action_and_value.1} parent=0 // pred_check
    _
  $region3: #{action_and_value.1} parent=0 // pred_check_branch
    %9 = sbr.rel (0) target = $region5
  $region4: #{action_and_value.1} parent=0 // pred_region
    _
  $region5: #{action_and_value.1} parent=0 // pred_fallthru
    _
  // Predicated region
  $region6: #{action_and_value.1} parent=0 // pred_check
    _
  $region7: #{action_and_value.1} parent=0 // pred_check_branch
    %11 = sbr.rel (0) target = $region9
  $region8: #{action_and_value.1} parent=0 // pred_region
    _
  $region9: #{action_and_value.1} parent=0 // pred_fallthru
    _
  // Predicated region
  $region10: #{action_and_value.1} parent=0 // pred_check
    _
  $region11: #{action_and_value.1} parent=0 // pred_check_branch
    %13 = sbr.rel (0) target = $region13
  $region12: #{action_and_value.1} parent=0 // pred_region
    _
  $region13: #{action_and_value.1} parent=0 // pred_fallthru
    _
  %v14 = vld [vmem:[%s2] sm:$0x1]
  %v15 = vld [vmem:[%s2 + $0x1] sm:$0x1]
  %v16 = vld [vmem:[%s2 + $0x2] sm:$0x1]
  %v17 = vld [vmem:[%s2 + $0x3] sm:$0x1]
  %v18 = vld [vmem:[%s2 + $0x4] sm:$0x1]
  %v19 = vld [vmem:[%s0] sm:$0xff]
  %v20 = vld [vmem:[%s0 + $0x8] sm:$0xff]
  %v21 = vld [vmem:[%s0 + $0x10] sm:$0xff]
  %v22 = vld [vmem:[%s0 + $0x18] sm:$0xff]
  %v23 = vld [vmem:[%s1] sm:$0xff]
  %v24 = vld [vmem:[%s1 + $0x8] sm:$0xff]
  %v25 = vld [vmem:[%s1 + $0x10] sm:$0xff]
  %v26 = vld [vmem:[%s1 + $0x18] sm:$0xff]
  %v27 = vld [vmem:[%s1 + $0x20] sm:$0xf]
  %v28 = vlaneseq
  %v29 = vshrl.u32 %v28, 7
  %v30 = vsub.s32 0, %v29
  %v31 = vrot.slane %v14, %v30
  %vm32 = vcmask 293888
  %v34 = vsel %vm32, %v19, 0
  %v37 = vsel %vm32, %v20, 0
  %v40 = vsel %vm32, %v21, 0
  %v43 = vsel %vm32, %v22, 0
  %vm45 = vcmask 1043456
  %v47 = vsel %vm45, %v27, 0
  %49 = vmatprep.subr.mxu0 0.0
  %50 = vmatpush1.msra.mxu0 %v23
  %51 = vmatprep.subr.mxu0 0.0
  %52 = vmatpush1.msra.mxu0 %v24
  %53 = vmatprep.subr.mxu0 0.0
  %54 = vmatpush1.msra.mxu0 %v25
  %55 = vmatprep.subr.mxu0 0.0
  %56 = vmatpush1.msra.mxu0 %v26
  %57 = vmatprep.subr.mxu0 0.0
  %58 = vmatpush1.msra.mxu0 %v47
  %59 = vmatprep.subr.mxu0 0.0
  %60 = vmatpush1.msra.mxu0 0.0
  %61 = vmatprep.subr.mxu0 0.0
  %62 = vmatpush1.msra.mxu0 0.0
  %63 = vmatprep.subr.mxu0 0.0
  %64 = vmatpush1.msra.mxu0 0.0
  %65 = vmatprep.subr.mxu0 0.0
  %66 = vmatpush1.msra.mxu0 0.0
  %67 = vmatprep.subr.mxu0 0.0
  %68 = vmatpush1.msra.mxu0 0.0
  %69 = vmatprep.subr.mxu0 0.0
  %70 = vmatpush1.msra.mxu0 0.0
  %71 = vmatprep.subr.mxu0 0.0
  %72 = vmatpush1.msra.mxu0 0.0
  %73 = vmatprep.subr.mxu0 0.0
  %74 = vmatpush1.msra.mxu0 0.0
  %75 = vmatprep.subr.mxu0 0.0
  %76 = vmatpush1.msra.mxu0 0.0
  %77 = vmatprep.subr.mxu0 0.0
  %78 = vmatpush1.msra.mxu0 0.0
  %79 = vmatprep.subr.mxu0 0.0
  %80 = vmatpush1.msra.mxu0 0.0
  %81 = vmatprep.subr.mxu0 0.0
  %82 = vmatpush1.msra.mxu0 0.0
  %83 = vmatprep.subr.mxu0 0.0
  %84 = vmatpush1.msra.mxu0 0.0
  %85 = vmatprep.subr.mxu0 0.0
  %86 = vmatpush1.msra.mxu0 0.0
  %87 = vmatprep.subr.mxu0 0.0
  %88 = vmatpush1.msra.mxu0 0.0
  %89 = vmatprep.subr.mxu0 0.0
  %90 = vmatpush1.msra.mxu0 0.0
  %91 = vmatprep.subr.mxu0 0.0
  %92 = vmatpush1.msra.mxu0 0.0
  %93 = vmatprep.subr.mxu0 0.0
  %94 = vmatpush1.msra.mxu0 0.0
  %95 = vmatprep.subr.mxu0 0.0
  %96 = vmatpush1.msra.mxu0 0.0
  %97 = vmatprep.subr.mxu0 0.0
  %98 = vmatpush1.msra.mxu0 0.0
  %99 = vmatprep.subr.mxu0 0.0
  %100 = vmatpush1.msra.mxu0 0.0
  %101 = vmatprep.subr.mxu0 0.0
  %102 = vmatpush1.msra.mxu0 0.0
  %103 = vmatprep.subr.mxu0 0.0
  %104 = vmatpush1.msra.mxu0 0.0
  %105 = vmatprep.subr.mxu0 0.0
  %106 = vmatpush1.msra.mxu0 0.0
  %107 = vmatprep.subr.mxu0 0.0
  %108 = vmatpush1.msra.mxu0 0.0
  %109 = vmatprep.subr.mxu0 0.0
  %110 = vmatpush1.msra.mxu0 0.0
  %111 = vmatprep.subr.mxu0 0.0
  %112 = vmatpush1.msra.mxu0 0.0
  %113 = vmatprep.mubr.f32.mxu0 0.0
  %114 = vmatmul.mubr.f32.gmra.mrb[0].mxu0 %v34
  %v115 = vpop.f32.mrb[0].mxu0
  %v116 = vadd.f32 %v31, %v115
  %v117 = vpop.f32.mrb[0].mxu0
  %118 = vmatprep.mubr.f32.mxu0 0.0
  %119 = vmatmul.mubr.f32.gmra.mrb[0].mxu0 %v37
  %v120 = vpop.f32.mrb[0].mxu0
  %v121 = vadd.f32 %v31, %v120
  %v122 = vpop.f32.mrb[0].mxu0
  %123 = vmatprep.mubr.f32.mxu0 0.0
  %124 = vmatmul.mubr.f32.gmra.mrb[0].mxu0 %v40
  %v125 = vpop.f32.mrb[0].mxu0
  %v126 = vadd.f32 %v31, %v125
  %v127 = vpop.f32.mrb[0].mxu0
  %128 = vmatprep.mubr.f32.mxu0 0.0
  %129 = vmatmul.mubr.f32.gmra.mrb[0].mxu0 %v43
  %v130 = vpop.f32.mrb[0].mxu0
  %v131 = vadd.f32 %v31, %v130
  %v132 = vpop.f32.mrb[0].mxu0
  %133 = vdwg.mxu0
  %v134 = vmax.f32 %v116, 0.0
  %v135 = vmax.f32 %v121, 0.0
  %v136 = vmax.f32 %v126, 0.0
  %v137 = vmax.f32 %v131, 0.0
  %v138 = vld [vmem:[%s1 + $0x28] sm:$0xff]
  %v139 = vld [vmem:[%s1 + $0x30] sm:$0xff]
  %v140 = vld [vmem:[%s1 + $0x38] sm:$0xff]
  %v141 = vld [vmem:[%s1 + $0x40] sm:$0xff]
  %v142 = vld [vmem:[%s1 + $0x48] sm:$0xff]
  %v143 = vld [vmem:[%s1 + $0x50] sm:$0xff]
  %v144 = vld [vmem:[%s1 + $0x58] sm:$0xff]
  %v145 = vld [vmem:[%s1 + $0x60] sm:$0xff]
  %v147 = vrot.slane %v134, 2
  %vm148 = vcmask 261120
  %v149 = vsel %vm148, %v147, 0
  %151 = vmatprep.subr.mxu0 0.0
  %152 = vmatpush1.msra.mxu0 %v142
  %153 = vmatprep.subr.mxu0 0.0
  %154 = vmatpush1.msra.mxu0 %v143
  %155 = vmatprep.subr.mxu0 0.0
  %156 = vmatpush1.msra.mxu0 %v144
  %157 = vmatprep.subr.mxu0 0.0
  %158 = vmatpush1.msra.mxu0 %v145
  %159 = vmatprep.subr.mxu0 0.0
  %160 = vmatpush1.msra.mxu0 0.0
  %161 = vmatprep.subr.mxu0 0.0
  %162 = vmatpush1.msra.mxu0 0.0
  %163 = vmatprep.subr.mxu0 0.0
  %164 = vmatpush1.msra.mxu0 0.0
  %165 = vmatprep.subr.mxu0 0.0
  %166 = vmatpush1.msra.mxu0 0.0
  %167 = vmatprep.subr.mxu0 0.0
  %168 = vmatpush1.msra.mxu0 0.0
  %169 = vmatprep.subr.mxu0 0.0
  %170 = vmatpush1.msra.mxu0 0.0
  %171 = vmatprep.subr.mxu0 0.0
  %172 = vmatpush1.msra.mxu0 0.0
  %173 = vmatprep.subr.mxu0 0.0
  %174 = vmatpush1.msra.mxu0 0.0
  %175 = vmatprep.subr.mxu0 0.0
  %176 = vmatpush1.msra.mxu0 0.0
  %177 = vmatprep.subr.mxu0 0.0
  %178 = vmatpush1.msra.mxu0 0.0
  %179 = vmatprep.subr.mxu0 0.0
  %180 = vmatpush1.msra.mxu0 0.0
  %181 = vmatprep.subr.mxu0 0.0
  %182 = vmatpush1.msra.mxu0 0.0
  %183 = vmatprep.subr.mxu0 0.0
  %184 = vmatpush1.msra.mxu0 0.0
  %185 = vmatprep.subr.mxu0 0.0
  %186 = vmatpush1.msra.mxu0 0.0
  %187 = vmatprep.subr.mxu0 0.0
  %188 = vmatpush1.msra.mxu0 0.0
  %189 = vmatprep.subr.mxu0 0.0
  %190 = vmatpush1.msra.mxu0 0.0
  %191 = vmatprep.subr.mxu0 0.0
  %192 = vmatpush1.msra.mxu0 0.0
  %193 = vmatprep.subr.mxu0 0.0
  %194 = vmatpush1.msra.mxu0 0.0
  %195 = vmatprep.subr.mxu0 0.0
  %196 = vmatpush1.msra.mxu0 0.0
  %197 = vmatprep.subr.mxu0 0.0
  %198 = vmatpush1.msra.mxu0 0.0
  %199 = vmatprep.subr.mxu0 0.0
  %200 = vmatpush1.msra.mxu0 0.0
  %201 = vmatprep.subr.mxu0 0.0
  %202 = vmatpush1.msra.mxu0 0.0
  %203 = vmatprep.subr.mxu0 0.0
  %204 = vmatpush1.msra.mxu0 0.0
  %205 = vmatprep.subr.mxu0 0.0
  %206 = vmatpush1.msra.mxu0 0.0
  %207 = vmatprep.subr.mxu0 0.0
  %208 = vmatpush1.msra.mxu0 0.0
  %209 = vmatprep.subr.mxu0 0.0
  %210 = vmatpush1.msra.mxu0 0.0
  %211 = vmatprep.subr.mxu0 0.0
  %212 = vmatpush1.msra.mxu0 0.0
  %213 = vmatprep.subr.mxu0 0.0
  %214 = vmatpush1.msra.mxu0 0.0
  %215 = vmatprep.mubr.f32.mxu0 0.0
  %216 = vmatmul.mubr.f32.gmra.mrb[0].mxu0 %v149
  %v217 = vpop.f32.mrb[0].mxu0
  %v218 = vadd.f32 0.0, %v217
  %v219 = vpop.f32.mrb[0].mxu0
  %220 = vdwg.mxu0
  %v221 = vsel %vm148, %v134, 0
  %223 = vmatprep.subr.mxu0 0.0
  %224 = vmatpush1.msra.mxu0 %v138
  %225 = vmatprep.subr.mxu0 0.0
  %226 = vmatpush1.msra.mxu0 %v139
  %227 = vmatprep.subr.mxu0 0.0
  %228 = vmatpush1.msra.mxu0 %v140
  %229 = vmatprep.subr.mxu0 0.0
  %230 = vmatpush1.msra.mxu0 %v141
  %231 = vmatprep.subr.mxu0 0.0
  %232 = vmatpush1.msra.mxu0 0.0
  %233 = vmatprep.subr.mxu0 0.0
  %234 = vmatpush1.msra.mxu0 0.0
  %235 = vmatprep.subr.mxu0 0.0
  %236 = vmatpush1.msra.mxu0 0.0
  %237 = vmatprep.subr.mxu0 0.0
  %238 = vmatpush1.msra.mxu0 0.0
  %239 = vmatprep.subr.mxu0 0.0
  %240 = vmatpush1.msra.mxu0 0.0
  %241 = vmatprep.subr.mxu0 0.0
  %242 = vmatpush1.msra.mxu0 0.0
  %243 = vmatprep.subr.mxu0 0.0
  %244 = vmatpush1.msra.mxu0 0.0
  %245 = vmatprep.subr.mxu0 0.0
  %246 = vmatpush1.msra.mxu0 0.0
  %247 = vmatprep.subr.mxu0 0.0
  %248 = vmatpush1.msra.mxu0 0.0
  %249 = vmatprep.subr.mxu0 0.0
  %250 = vmatpush1.msra.mxu0 0.0
  %251 = vmatprep.subr.mxu0 0.0
  %252 = vmatpush1.msra.mxu0 0.0
  %253 = vmatprep.subr.mxu0 0.0
  %254 = vmatpush1.msra.mxu0 0.0
  %255 = vmatprep.subr.mxu0 0.0
  %256 = vmatpush1.msra.mxu0 0.0
  %257 = vmatprep.subr.mxu0 0.0
  %258 = vmatpush1.msra.mxu0 0.0
  %259 = vmatprep.subr.mxu0 0.0
  %260 = vmatpush1.msra.mxu0 0.0
  %261 = vmatprep.subr.mxu0 0.0
  %262 = vmatpush1.msra.mxu0 0.0
  %263 = vmatprep.subr.mxu0 0.0
  %264 = vmatpush1.msra.mxu0 0.0
  %265 = vmatprep.subr.mxu0 0.0
  %266 = vmatpush1.msra.mxu0 0.0
  %267 = vmatprep.subr.mxu0 0.0
  %268 = vmatpush1.msra.mxu0 0.0
  %269 = vmatprep.subr.mxu0 0.0
  %270 = vmatpush1.msra.mxu0 0.0
  %271 = vmatprep.subr.mxu0 0.0
  %272 = vmatpush1.msra.mxu0 0.0
  %273 = vmatprep.subr.mxu0 0.0
  %274 = vmatpush1.msra.mxu0 0.0
  %275 = vmatprep.subr.mxu0 0.0
  %276 = vmatpush1.msra.mxu0 0.0
  %277 = vmatprep.subr.mxu0 0.0
  %278 = vmatpush1.msra.mxu0 0.0
  %279 = vmatprep.subr.mxu0 0.0
  %280 = vmatpush1.msra.mxu0 0.0
  %281 = vmatprep.subr.mxu0 0.0
  %282 = vmatpush1.msra.mxu0 0.0
  %283 = vmatprep.subr.mxu0 0.0
  %284 = vmatpush1.msra.mxu0 0.0
  %285 = vmatprep.subr.mxu0 0.0
  %286 = vmatpush1.msra.mxu0 0.0
  %287 = vmatprep.mubr.f32.mxu0 0.0
  %288 = vmatmul.mubr.f32.gmra.mrb[0].mxu0 %v221
  %v289 = vpop.f32.mrb[0].mxu0
  %v290 = vadd.f32 %v218, %v289
  %v291 = vpop.f32.mrb[0].mxu0
  %292 = vdwg.mxu0
  %v293 = vld [vmem:[%s1 + $0x68] sm:$0xff]
  %v294 = vld [vmem:[%s1 + $0x70] sm:$0xff]
  %v295 = vld [vmem:[%s1 + $0x78] sm:$0xff]
  %v296 = vld [vmem:[%s1 + $0x80] sm:$0xff]
  %v298 = vsel %vm148, %v135, 0
  %300 = vmatprep.subr.mxu0 0.0
  %301 = vmatpush1.msra.mxu0 %v293
  %302 = vmatprep.subr.mxu0 0.0
  %303 = vmatpush1.msra.mxu0 %v294
  %304 = vmatprep.subr.mxu0 0.0
  %305 = vmatpush1.msra.mxu0 %v295
  %306 = vmatprep.subr.mxu0 0.0
  %307 = vmatpush1.msra.mxu0 %v296
  %308 = vmatprep.subr.mxu0 0.0
  %309 = vmatpush1.msra.mxu0 0.0
  %310 = vmatprep.subr.mxu0 0.0
  %311 = vmatpush1.msra.mxu0 0.0
  %312 = vmatprep.subr.mxu0 0.0
  %313 = vmatpush1.msra.mxu0 0.0
  %314 = vmatprep.subr.mxu0 0.0
  %315 = vmatpush1.msra.mxu0 0.0
  %316 = vmatprep.subr.mxu0 0.0
  %317 = vmatpush1.msra.mxu0 0.0
  %318 = vmatprep.subr.mxu0 0.0
  %319 = vmatpush1.msra.mxu0 0.0
  %320 = vmatprep.subr.mxu0 0.0
  %321 = vmatpush1.msra.mxu0 0.0
  %322 = vmatprep.subr.mxu0 0.0
  %323 = vmatpush1.msra.mxu0 0.0
  %324 = vmatprep.subr.mxu0 0.0
  %325 = vmatpush1.msra.mxu0 0.0
  %326 = vmatprep.subr.mxu0 0.0
  %327 = vmatpush1.msra.mxu0 0.0
  %328 = vmatprep.subr.mxu0 0.0
  %329 = vmatpush1.msra.mxu0 0.0
  %330 = vmatprep.subr.mxu0 0.0
  %331 = vmatpush1.msra.mxu0 0.0
  %332 = vmatprep.subr.mxu0 0.0
  %333 = vmatpush1.msra.mxu0 0.0
  %334 = vmatprep.subr.mxu0 0.0
  %335 = vmatpush1.msra.mxu0 0.0
  %336 = vmatprep.subr.mxu0 0.0
  %337 = vmatpush1.msra.mxu0 0.0
  %338 = vmatprep.subr.mxu0 0.0
  %339 = vmatpush1.msra.mxu0 0.0
  %340 = vmatprep.subr.mxu0 0.0
  %341 = vmatpush1.msra.mxu0 0.0
  %342 = vmatprep.subr.mxu0 0.0
  %343 = vmatpush1.msra.mxu0 0.0
  %344 = vmatprep.subr.mxu0 0.0
  %345 = vmatpush1.msra.mxu0 0.0
  %346 = vmatprep.subr.mxu0 0.0
  %347 = vmatpush1.msra.mxu0 0.0
  %348 = vmatprep.subr.mxu0 0.0
  %349 = vmatpush1.msra.mxu0 0.0
  %350 = vmatprep.subr.mxu0 0.0
  %351 = vmatpush1.msra.mxu0 0.0
  %352 = vmatprep.subr.mxu0 0.0
  %353 = vmatpush1.msra.mxu0 0.0
  %354 = vmatprep.subr.mxu0 0.0
  %355 = vmatpush1.msra.mxu0 0.0
  %356 = vmatprep.subr.mxu0 0.0
  %357 = vmatpush1.msra.mxu0 0.0
  %358 = vmatprep.subr.mxu0 0.0
  %359 = vmatpush1.msra.mxu0 0.0
  %360 = vmatprep.subr.mxu0 0.0
  %361 = vmatpush1.msra.mxu0 0.0
  %362 = vmatprep.subr.mxu0 0.0
  %363 = vmatpush1.msra.mxu0 0.0
  %364 = vmatprep.mubr.f32.mxu0 0.0
  %365 = vmatmul.mubr.f32.gmra.mrb[0].mxu0 %v298
  %v366 = vpop.f32.mrb[0].mxu0
  %v367 = vadd.f32 0.0, %v366
  %v368 = vpop.f32.mrb[0].mxu0
  %369 = vdwg.mxu0
  %v370 = vadd.f32 %v290, %v367
  %v371 = vld [vmem:[%s1 + $0x88] sm:$0xff]
  %v372 = vld [vmem:[%s1 + $0x90] sm:$0xff]
  %v373 = vld [vmem:[%s1 + $0x98] sm:$0xff]
  %v374 = vld [vmem:[%s1 + $0xa0] sm:$0xff]
  %v375 = vrot.slane %v135, 2
  %v376 = vsel %vm148, %v375, 0
  %378 = vmatprep.subr.mxu0 0.0
  %379 = vmatpush1.msra.mxu0 %v371
  %380 = vmatprep.subr.mxu0 0.0
  %381 = vmatpush1.msra.mxu0 %v372
  %382 = vmatprep.subr.mxu0 0.0
  %383 = vmatpush1.msra.mxu0 %v373
  %384 = vmatprep.subr.mxu0 0.0
  %385 = vmatpush1.msra.mxu0 %v374
  %386 = vmatprep.subr.mxu0 0.0
  %387 = vmatpush1.msra.mxu0 0.0
  %388 = vmatprep.subr.mxu0 0.0
  %389 = vmatpush1.msra.mxu0 0.0
  %390 = vmatprep.subr.mxu0 0.0
  %391 = vmatpush1.msra.mxu0 0.0
  %392 = vmatprep.subr.mxu0 0.0
  %393 = vmatpush1.msra.mxu0 0.0
  %394 = vmatprep.subr.mxu0 0.0
  %395 = vmatpush1.msra.mxu0 0.0
  %396 = vmatprep.subr.mxu0 0.0
  %397 = vmatpush1.msra.mxu0 0.0
  %398 = vmatprep.subr.mxu0 0.0
  %399 = vmatpush1.msra.mxu0 0.0
  %400 = vmatprep.subr.mxu0 0.0
  %401 = vmatpush1.msra.mxu0 0.0
  %402 = vmatprep.subr.mxu0 0.0
  %403 = vmatpush1.msra.mxu0 0.0
  %404 = vmatprep.subr.mxu0 0.0
  %405 = vmatpush1.msra.mxu0 0.0
  %406 = vmatprep.subr.mxu0 0.0
  %407 = vmatpush1.msra.mxu0 0.0
  %408 = vmatprep.subr.mxu0 0.0
  %409 = vmatpush1.msra.mxu0 0.0
  %410 = vmatprep.subr.mxu0 0.0
  %411 = vmatpush1.msra.mxu0 0.0
  %412 = vmatprep.subr.mxu0 0.0
  %413 = vmatpush1.msra.mxu0 0.0
  %414 = vmatprep.subr.mxu0 0.0
  %415 = vmatpush1.msra.mxu0 0.0
  %416 = vmatprep.subr.mxu0 0.0
  %417 = vmatpush1.msra.mxu0 0.0
  %418 = vmatprep.subr.mxu0 0.0
  %419 = vmatpush1.msra.mxu0 0.0
  %420 = vmatprep.subr.mxu0 0.0
  %421 = vmatpush1.msra.mxu0 0.0
  %422 = vmatprep.subr.mxu0 0.0
  %423 = vmatpush1.msra.mxu0 0.0
  %424 = vmatprep.subr.mxu0 0.0
  %425 = vmatpush1.msra.mxu0 0.0
  %426 = vmatprep.subr.mxu0 0.0
  %427 = vmatpush1.msra.mxu0 0.0
  %428 = vmatprep.subr.mxu0 0.0
  %429 = vmatpush1.msra.mxu0 0.0
  %430 = vmatprep.subr.mxu0 0.0
  %431 = vmatpush1.msra.mxu0 0.0
  %432 = vmatprep.subr.mxu0 0.0
  %433 = vmatpush1.msra.mxu0 0.0
  %434 = vmatprep.subr.mxu0 0.0
  %435 = vmatpush1.msra.mxu0 0.0
  %436 = vmatprep.subr.mxu0 0.0
  %437 = vmatpush1.msra.mxu0 0.0
  %438 = vmatprep.subr.mxu0 0.0
  %439 = vmatpush1.msra.mxu0 0.0
  %440 = vmatprep.subr.mxu0 0.0
  %441 = vmatpush1.msra.mxu0 0.0
  %442 = vmatprep.mubr.f32.mxu0 0.0
  %443 = vmatmul.mubr.f32.gmra.mrb[0].mxu0 %v376
  %v444 = vpop.f32.mrb[0].mxu0
  %v445 = vadd.f32 0.0, %v444
  %v446 = vpop.f32.mrb[0].mxu0
  %447 = vdwg.mxu0
  %v448 = vadd.f32 %v370, %v445
  %v449 = vlaneseq
  %v450 = vshrl.u32 %v449, 7
  %v451 = vsub.s32 0, %v450
  %v452 = vrot.slane %v15, %v451
  %v453 = vadd.f32 %v448, %v452
  %v454 = vmax.f32 %v453, 0.0
  %455 = vmatprep.subr.mxu0 0.0
  %456 = vmatpush1.msra.mxu0 %v142
  %457 = vmatprep.subr.mxu0 0.0
  %458 = vmatpush1.msra.mxu0 %v143
  %459 = vmatprep.subr.mxu0 0.0
  %460 = vmatpush1.msra.mxu0 %v144
  %461 = vmatprep.subr.mxu0 0.0
  %462 = vmatpush1.msra.mxu0 %v145
  %463 = vmatprep.subr.mxu0 0.0
  %464 = vmatpush1.msra.mxu0 0.0
  %465 = vmatprep.subr.mxu0 0.0
  %466 = vmatpush1.msra.mxu0 0.0
  %467 = vmatprep.subr.mxu0 0.0
  %468 = vmatpush1.msra.mxu0 0.0
  %469 = vmatprep.subr.mxu0 0.0
  %470 = vmatpush1.msra.mxu0 0.0
  %471 = vmatprep.subr.mxu0 0.0
  %472 = vmatpush1.msra.mxu0 0.0
  %473 = vmatprep.subr.mxu0 0.0
  %474 = vmatpush1.msra.mxu0 0.0
  %475 = vmatprep.subr.mxu0 0.0
  %476 = vmatpush1.msra.mxu0 0.0
  %477 = vmatprep.subr.mxu0 0.0
  %478 = vmatpush1.msra.mxu0 0.0
  %479 = vmatprep.subr.mxu0 0.0
  %480 = vmatpush1.msra.mxu0 0.0
  %481 = vmatprep.subr.mxu0 0.0
  %482 = vmatpush1.msra.mxu0 0.0
  %483 = vmatprep.subr.mxu0 0.0
  %484 = vmatpush1.msra.mxu0 0.0
  %485 = vmatprep.subr.mxu0 0.0
  %486 = vmatpush1.msra.mxu0 0.0
  %487 = vmatprep.subr.mxu0 0.0
  %488 = vmatpush1.msra.mxu0 0.0
  %489 = vmatprep.subr.mxu0 0.0
  %490 = vmatpush1.msra.mxu0 0.0
  %491 = vmatprep.subr.mxu0 0.0
  %492 = vmatpush1.msra.mxu0 0.0
  %493 = vmatprep.subr.mxu0 0.0
  %494 = vmatpush1.msra.mxu0 0.0
  %495 = vmatprep.subr.mxu0 0.0
  %496 = vmatpush1.msra.mxu0 0.0
  %497 = vmatprep.subr.mxu0 0.0
  %498 = vmatpush1.msra.mxu0 0.0
  %499 = vmatprep.subr.mxu0 0.0
  %500 = vmatpush1.msra.mxu0 0.0
  %501 = vmatprep.subr.mxu0 0.0
  %502 = vmatpush1.msra.mxu0 0.0
  %503 = vmatprep.subr.mxu0 0.0
  %504 = vmatpush1.msra.mxu0 0.0
  %505 = vmatprep.subr.mxu0 0.0
  %506 = vmatpush1.msra.mxu0 0.0
  %507 = vmatprep.subr.mxu0 0.0
  %508 = vmatpush1.msra.mxu0 0.0
  %509 = vmatprep.subr.mxu0 0.0
  %510 = vmatpush1.msra.mxu0 0.0
  %511 = vmatprep.subr.mxu0 0.0
  %512 = vmatpush1.msra.mxu0 0.0
  %513 = vmatprep.subr.mxu0 0.0
  %514 = vmatpush1.msra.mxu0 0.0
  %515 = vmatprep.subr.mxu0 0.0
  %516 = vmatpush1.msra.mxu0 0.0
  %517 = vmatprep.subr.mxu0 0.0
  %518 = vmatpush1.msra.mxu0 0.0
  %519 = vmatprep.mubr.f32.mxu0 0.0
  %520 = vmatmul.mubr.f32.gmra.mrb[0].mxu0 %v376
  %v521 = vpop.f32.mrb[0].mxu0
  %v522 = vadd.f32 0.0, %v521
  %v523 = vpop.f32.mrb[0].mxu0
  %524 = vdwg.mxu0
  %525 = vmatprep.subr.mxu0 0.0
  %526 = vmatpush1.msra.mxu0 %v138
  %527 = vmatprep.subr.mxu0 0.0
  %528 = vmatpush1.msra.mxu0 %v139
  %529 = vmatprep.subr.mxu0 0.0
  %530 = vmatpush1.msra.mxu0 %v140
  %531 = vmatprep.subr.mxu0 0.0
  %532 = vmatpush1.msra.mxu0 %v141
  %533 = vmatprep.subr.mxu0 0.0
  %534 = vmatpush1.msra.mxu0 0.0
  %535 = vmatprep.subr.mxu0 0.0
  %536 = vmatpush1.msra.mxu0 0.0
  %537 = vmatprep.subr.mxu0 0.0
  %538 = vmatpush1.msra.mxu0 0.0
  %539 = vmatprep.subr.mxu0 0.0
  %540 = vmatpush1.msra.mxu0 0.0
  %541 = vmatprep.subr.mxu0 0.0
  %542 = vmatpush1.msra.mxu0 0.0
  %543 = vmatprep.subr.mxu0 0.0
  %544 = vmatpush1.msra.mxu0 0.0
  %545 = vmatprep.subr.mxu0 0.0
  %546 = vmatpush1.msra.mxu0 0.0
  %547 = vmatprep.subr.mxu0 0.0
  %548 = vmatpush1.msra.mxu0 0.0
  %549 = vmatprep.subr.mxu0 0.0
  %550 = vmatpush1.msra.mxu0 0.0
  %551 = vmatprep.subr.mxu0 0.0
  %552 = vmatpush1.msra.mxu0 0.0
  %553 = vmatprep.subr.mxu0 0.0
  %554 = vmatpush1.msra.mxu0 0.0
  %555 = vmatprep.subr.mxu0 0.0
  %556 = vmatpush1.msra.mxu0 0.0
  %557 = vmatprep.subr.mxu0 0.0
  %558 = vmatpush1.msra.mxu0 0.0
  %559 = vmatprep.subr.mxu0 0.0
  %560 = vmatpush1.msra.mxu0 0.0
  %561 = vmatprep.subr.mxu0 0.0
  %562 = vmatpush1.msra.mxu0 0.0
  %563 = vmatprep.subr.mxu0 0.0
  %564 = vmatpush1.msra.mxu0 0.0
  %565 = vmatprep.subr.mxu0 0.0
  %566 = vmatpush1.msra.mxu0 0.0
  %567 = vmatprep.subr.mxu0 0.0
  %568 = vmatpush1.msra.mxu0 0.0
  %569 = vmatprep.subr.mxu0 0.0
  %570 = vmatpush1.msra.mxu0 0.0
  %571 = vmatprep.subr.mxu0 0.0
  %572 = vmatpush1.msra.mxu0 0.0
  %573 = vmatprep.subr.mxu0 0.0
  %574 = vmatpush1.msra.mxu0 0.0
  %575 = vmatprep.subr.mxu0 0.0
  %576 = vmatpush1.msra.mxu0 0.0
  %577 = vmatprep.subr.mxu0 0.0
  %578 = vmatpush1.msra.mxu0 0.0
  %579 = vmatprep.subr.mxu0 0.0
  %580 = vmatpush1.msra.mxu0 0.0
  %581 = vmatprep.subr.mxu0 0.0
  %582 = vmatpush1.msra.mxu0 0.0
  %583 = vmatprep.subr.mxu0 0.0
  %584 = vmatpush1.msra.mxu0 0.0
  %585 = vmatprep.subr.mxu0 0.0
  %586 = vmatpush1.msra.mxu0 0.0
  %587 = vmatprep.subr.mxu0 0.0
  %588 = vmatpush1.msra.mxu0 0.0
  %589 = vmatprep.mubr.f32.mxu0 0.0
  %590 = vmatmul.mubr.f32.gmra.mrb[0].mxu0 %v298
  %v591 = vpop.f32.mrb[0].mxu0
  %v592 = vadd.f32 %v522, %v591
  %v593 = vpop.f32.mrb[0].mxu0
  %594 = vdwg.mxu0
  %v596 = vsel %vm148, %v136, 0
  %598 = vmatprep.subr.mxu0 0.0
  %599 = vmatpush1.msra.mxu0 %v293
  %600 = vmatprep.subr.mxu0 0.0
  %601 = vmatpush1.msra.mxu0 %v294
  %602 = vmatprep.subr.mxu0 0.0
  %603 = vmatpush1.msra.mxu0 %v295
  %604 = vmatprep.subr.mxu0 0.0
  %605 = vmatpush1.msra.mxu0 %v296
  %606 = vmatprep.subr.mxu0 0.0
  %607 = vmatpush1.msra.mxu0 0.0
  %608 = vmatprep.subr.mxu0 0.0
  %609 = vmatpush1.msra.mxu0 0.0
  %610 = vmatprep.subr.mxu0 0.0
  %611 = vmatpush1.msra.mxu0 0.0
  %612 = vmatprep.subr.mxu0 0.0
  %613 = vmatpush1.msra.mxu0 0.0
  %614 = vmatprep.subr.mxu0 0.0
  %615 = vmatpush1.msra.mxu0 0.0
  %616 = vmatprep.subr.mxu0 0.0
  %617 = vmatpush1.msra.mxu0 0.0
  %618 = vmatprep.subr.mxu0 0.0
  %619 = vmatpush1.msra.mxu0 0.0
  %620 = vmatprep.subr.mxu0 0.0
  %621 = vmatpush1.msra.mxu0 0.0
  %622 = vmatprep.subr.mxu0 0.0
  %623 = vmatpush1.msra.mxu0 0.0
  %624 = vmatprep.subr.mxu0 0.0
  %625 = vmatpush1.msra.mxu0 0.0
  %626 = vmatprep.subr.mxu0 0.0
  %627 = vmatpush1.msra.mxu0 0.0
  %628 = vmatprep.subr.mxu0 0.0
  %629 = vmatpush1.msra.mxu0 0.0
  %630 = vmatprep.subr.mxu0 0.0
  %631 = vmatpush1.msra.mxu0 0.0
  %632 = vmatprep.subr.mxu0 0.0
  %633 = vmatpush1.msra.mxu0 0.0
  %634 = vmatprep.subr.mxu0 0.0
  %635 = vmatpush1.msra.mxu0 0.0
  %636 = vmatprep.subr.mxu0 0.0
  %637 = vmatpush1.msra.mxu0 0.0
  %638 = vmatprep.subr.mxu0 0.0
  %639 = vmatpush1.msra.mxu0 0.0
  %640 = vmatprep.subr.mxu0 0.0
  %641 = vmatpush1.msra.mxu0 0.0
  %642 = vmatprep.subr.mxu0 0.0
  %643 = vmatpush1.msra.mxu0 0.0
  %644 = vmatprep.subr.mxu0 0.0
  %645 = vmatpush1.msra.mxu0 0.0
  %646 = vmatprep.subr.mxu0 0.0
  %647 = vmatpush1.msra.mxu0 0.0
  %648 = vmatprep.subr.mxu0 0.0
  %649 = vmatpush1.msra.mxu0 0.0
  %650 = vmatprep.subr.mxu0 0.0
  %651 = vmatpush1.msra.mxu0 0.0
  %652 = vmatprep.subr.mxu0 0.0
  %653 = vmatpush1.msra.mxu0 0.0
  %654 = vmatprep.subr.mxu0 0.0
  %655 = vmatpush1.msra.mxu0 0.0
  %656 = vmatprep.subr.mxu0 0.0
  %657 = vmatpush1.msra.mxu0 0.0
  %658 = vmatprep.subr.mxu0 0.0
  %659 = vmatpush1.msra.mxu0 0.0
  %660 = vmatprep.subr.mxu0 0.0
  %661 = vmatpush1.msra.mxu0 0.0
  %662 = vmatprep.mubr.f32.mxu0 0.0
  %663 = vmatmul.mubr.f32.gmra.mrb[0].mxu0 %v596
  %v664 = vpop.f32.mrb[0].mxu0
  %v665 = vadd.f32 0.0, %v664
  %v666 = vpop.f32.mrb[0].mxu0
  %667 = vdwg.mxu0
  %v668 = vadd.f32 %v592, %v665
  %v669 = vrot.slane %v136, 2
  %v670 = vsel %vm148, %v669, 0
  %672 = vmatprep.subr.mxu0 0.0
  %673 = vmatpush1.msra.mxu0 %v371
  %674 = vmatprep.subr.mxu0 0.0
  %675 = vmatpush1.msra.mxu0 %v372
  %676 = vmatprep.subr.mxu0 0.0
  %677 = vmatpush1.msra.mxu0 %v373
  %678 = vmatprep.subr.mxu0 0.0
  %679 = vmatpush1.msra.mxu0 %v374
  %680 = vmatprep.subr.mxu0 0.0
  %681 = vmatpush1.msra.mxu0 0.0
  %682 = vmatprep.subr.mxu0 0.0
  %683 = vmatpush1.msra.mxu0 0.0
  %684 = vmatprep.subr.mxu0 0.0
  %685 = vmatpush1.msra.mxu0 0.0
  %686 = vmatprep.subr.mxu0 0.0
  %687 = vmatpush1.msra.mxu0 0.0
  %688 = vmatprep.subr.mxu0 0.0
  %689 = vmatpush1.msra.mxu0 0.0
  %690 = vmatprep.subr.mxu0 0.0
  %691 = vmatpush1.msra.mxu0 0.0
  %692 = vmatprep.subr.mxu0 0.0
  %693 = vmatpush1.msra.mxu0 0.0
  %694 = vmatprep.subr.mxu0 0.0
  %695 = vmatpush1.msra.mxu0 0.0
  %696 = vmatprep.subr.mxu0 0.0
  %697 = vmatpush1.msra.mxu0 0.0
  %698 = vmatprep.subr.mxu0 0.0
  %699 = vmatpush1.msra.mxu0 0.0
  %700 = vmatprep.subr.mxu0 0.0
  %701 = vmatpush1.msra.mxu0 0.0
  %702 = vmatprep.subr.mxu0 0.0
  %703 = vmatpush1.msra.mxu0 0.0
  %704 = vmatprep.subr.mxu0 0.0
  %705 = vmatpush1.msra.mxu0 0.0
  %706 = vmatprep.subr.mxu0 0.0
  %707 = vmatpush1.msra.mxu0 0.0
  %708 = vmatprep.subr.mxu0 0.0
  %709 = vmatpush1.msra.mxu0 0.0
  %710 = vmatprep.subr.mxu0 0.0
  %711 = vmatpush1.msra.mxu0 0.0
  %712 = vmatprep.subr.mxu0 0.0
  %713 = vmatpush1.msra.mxu0 0.0
  %714 = vmatprep.subr.mxu0 0.0
  %715 = vmatpush1.msra.mxu0 0.0
  %716 = vmatprep.subr.mxu0 0.0
  %717 = vmatpush1.msra.mxu0 0.0
  %718 = vmatprep.subr.mxu0 0.0
  %719 = vmatpush1.msra.mxu0 0.0
  %720 = vmatprep.subr.mxu0 0.0
  %721 = vmatpush1.msra.mxu0 0.0
  %722 = vmatprep.subr.mxu0 0.0
  %723 = vmatpush1.msra.mxu0 0.0
  %724 = vmatprep.subr.mxu0 0.0
  %725 = vmatpush1.msra.mxu0 0.0
  %726 = vmatprep.subr.mxu0 0.0
  %727 = vmatpush1.msra.mxu0 0.0
  %728 = vmatprep.subr.mxu0 0.0
  %729 = vmatpush1.msra.mxu0 0.0
  %730 = vmatprep.subr.mxu0 0.0
  %731 = vmatpush1.msra.mxu0 0.0
  %732 = vmatprep.subr.mxu0 0.0
  %733 = vmatpush1.msra.mxu0 0.0
  %734 = vmatprep.subr.mxu0 0.0
  %735 = vmatpush1.msra.mxu0 0.0
  %736 = vmatprep.mubr.f32.mxu0 0.0
  %737 = vmatmul.mubr.f32.gmra.mrb[0].mxu0 %v670
  %v738 = vpop.f32.mrb[0].mxu0
  %v739 = vadd.f32 0.0, %v738
  %v740 = vpop.f32.mrb[0].mxu0
  %741 = vdwg.mxu0
  %v742 = vadd.f32 %v668, %v739
  %v743 = vadd.f32 %v742, %v452
  %v744 = vmax.f32 %v743, 0.0
  %745 = vmatprep.subr.mxu0 0.0
  %746 = vmatpush1.msra.mxu0 %v142
  %747 = vmatprep.subr.mxu0 0.0
  %748 = vmatpush1.msra.mxu0 %v143
  %749 = vmatprep.subr.mxu0 0.0
  %750 = vmatpush1.msra.mxu0 %v144
  %751 = vmatprep.subr.mxu0 0.0
  %752 = vmatpush1.msra.mxu0 %v145
  %753 = vmatprep.subr.mxu0 0.0
  %754 = vmatpush1.msra.mxu0 0.0
  %755 = vmatprep.subr.mxu0 0.0
  %756 = vmatpush1.msra.mxu0 0.0
  %757 = vmatprep.subr.mxu0 0.0
  %758 = vmatpush1.msra.mxu0 0.0
  %759 = vmatprep.subr.mxu0 0.0
  %760 = vmatpush1.msra.mxu0 0.0
  %761 = vmatprep.subr.mxu0 0.0
  %762 = vmatpush1.msra.mxu0 0.0
  %763 = vmatprep.subr.mxu0 0.0
  %764 = vmatpush1.msra.mxu0 0.0
  %765 = vmatprep.subr.mxu0 0.0
  %766 = vmatpush1.msra.mxu0 0.0
  %767 = vmatprep.subr.mxu0 0.0
  %768 = vmatpush1.msra.mxu0 0.0
  %769 = vmatprep.subr.mxu0 0.0
  %770 = vmatpush1.msra.mxu0 0.0
  %771 = vmatprep.subr.mxu0 0.0
  %772 = vmatpush1.msra.mxu0 0.0
  %773 = vmatprep.subr.mxu0 0.0
  %774 = vmatpush1.msra.mxu0 0.0
  %775 = vmatprep.subr.mxu0 0.0
  %776 = vmatpush1.msra.mxu0 0.0
  %777 = vmatprep.subr.mxu0 0.0
  %778 = vmatpush1.msra.mxu0 0.0
  %779 = vmatprep.subr.mxu0 0.0
  %780 = vmatpush1.msra.mxu0 0.0
  %781 = vmatprep.subr.mxu0 0.0
  %782 = vmatpush1.msra.mxu0 0.0
  %783 = vmatprep.subr.mxu0 0.0
  %784 = vmatpush1.msra.mxu0 0.0
  %785 = vmatprep.subr.mxu0 0.0
  %786 = vmatpush1.msra.mxu0 0.0
  %787 = vmatprep.subr.mxu0 0.0
  %788 = vmatpush1.msra.mxu0 0.0
  %789 = vmatprep.subr.mxu0 0.0
  %790 = vmatpush1.msra.mxu0 0.0
  %791 = vmatprep.subr.mxu0 0.0
  %792 = vmatpush1.msra.mxu0 0.0
  %793 = vmatprep.subr.mxu0 0.0
  %794 = vmatpush1.msra.mxu0 0.0
  %795 = vmatprep.subr.mxu0 0.0
  %796 = vmatpush1.msra.mxu0 0.0
  %797 = vmatprep.subr.mxu0 0.0
  %798 = vmatpush1.msra.mxu0 0.0
  %799 = vmatprep.subr.mxu0 0.0
  %800 = vmatpush1.msra.mxu0 0.0
  %801 = vmatprep.subr.mxu0 0.0
  %802 = vmatpush1.msra.mxu0 0.0
  %803 = vmatprep.subr.mxu0 0.0
  %804 = vmatpush1.msra.mxu0 0.0
  %805 = vmatprep.subr.mxu0 0.0
  %806 = vmatpush1.msra.mxu0 0.0
  %807 = vmatprep.subr.mxu0 0.0
  %808 = vmatpush1.msra.mxu0 0.0
  %809 = vmatprep.mubr.f32.mxu0 0.0
  %810 = vmatmul.mubr.f32.gmra.mrb[0].mxu0 %v670
  %v811 = vpop.f32.mrb[0].mxu0
  %v812 = vadd.f32 0.0, %v811
  %v813 = vpop.f32.mrb[0].mxu0
  %814 = vdwg.mxu0
  %815 = vmatprep.subr.mxu0 0.0
  %816 = vmatpush1.msra.mxu0 %v138
  %817 = vmatprep.subr.mxu0 0.0
  %818 = vmatpush1.msra.mxu0 %v139
  %819 = vmatprep.subr.mxu0 0.0
  %820 = vmatpush1.msra.mxu0 %v140
  %821 = vmatprep.subr.mxu0 0.0
  %822 = vmatpush1.msra.mxu0 %v141
  %823 = vmatprep.subr.mxu0 0.0
  %824 = vmatpush1.msra.mxu0 0.0
  %825 = vmatprep.subr.mxu0 0.0
  %826 = vmatpush1.msra.mxu0 0.0
  %827 = vmatprep.subr.mxu0 0.0
  %828 = vmatpush1.msra.mxu0 0.0
  %829 = vmatprep.subr.mxu0 0.0
  %830 = vmatpush1.msra.mxu0 0.0
  %831 = vmatprep.subr.mxu0 0.0
  %832 = vmatpush1.msra.mxu0 0.0
  %833 = vmatprep.subr.mxu0 0.0
  %834 = vmatpush1.msra.mxu0 0.0
  %835 = vmatprep.subr.mxu0 0.0
  %836 = vmatpush1.msra.mxu0 0.0
  %837 = vmatprep.subr.mxu0 0.0
  %838 = vmatpush1.msra.mxu0 0.0
  %839 = vmatprep.subr.mxu0 0.0
  %840 = vmatpush1.msra.mxu0 0.0
  %841 = vmatprep.subr.mxu0 0.0
  %842 = vmatpush1.msra.mxu0 0.0
  %843 = vmatprep.subr.mxu0 0.0
  %844 = vmatpush1.msra.mxu0 0.0
  %845 = vmatprep.subr.mxu0 0.0
  %846 = vmatpush1.msra.mxu0 0.0
  %847 = vmatprep.subr.mxu0 0.0
  %848 = vmatpush1.msra.mxu0 0.0
  %849 = vmatprep.subr.mxu0 0.0
  %850 = vmatpush1.msra.mxu0 0.0
  %851 = vmatprep.subr.mxu0 0.0
  %852 = vmatpush1.msra.mxu0 0.0
  %853 = vmatprep.subr.mxu0 0.0
  %854 = vmatpush1.msra.mxu0 0.0
  %855 = vmatprep.subr.mxu0 0.0
  %856 = vmatpush1.msra.mxu0 0.0
  %857 = vmatprep.subr.mxu0 0.0
  %858 = vmatpush1.msra.mxu0 0.0
  %859 = vmatprep.subr.mxu0 0.0
  %860 = vmatpush1.msra.mxu0 0.0
  %861 = vmatprep.subr.mxu0 0.0
  %862 = vmatpush1.msra.mxu0 0.0
  %863 = vmatprep.subr.mxu0 0.0
  %864 = vmatpush1.msra.mxu0 0.0
  %865 = vmatprep.subr.mxu0 0.0
  %866 = vmatpush1.msra.mxu0 0.0
  %867 = vmatprep.subr.mxu0 0.0
  %868 = vmatpush1.msra.mxu0 0.0
  %869 = vmatprep.subr.mxu0 0.0
  %870 = vmatpush1.msra.mxu0 0.0
  %871 = vmatprep.subr.mxu0 0.0
  %872 = vmatpush1.msra.mxu0 0.0
  %873 = vmatprep.subr.mxu0 0.0
  %874 = vmatpush1.msra.mxu0 0.0
  %875 = vmatprep.subr.mxu0 0.0
  %876 = vmatpush1.msra.mxu0 0.0
  %877 = vmatprep.subr.mxu0 0.0
  %878 = vmatpush1.msra.mxu0 0.0
  %879 = vmatprep.mubr.f32.mxu0 0.0
  %880 = vmatmul.mubr.f32.gmra.mrb[0].mxu0 %v596
  %v881 = vpop.f32.mrb[0].mxu0
  %v882 = vadd.f32 %v812, %v881
  %v883 = vpop.f32.mrb[0].mxu0
  %884 = vdwg.mxu0
  %v886 = vsel %vm148, %v137, 0
  %888 = vmatprep.subr.mxu0 0.0
  %889 = vmatpush1.msra.mxu0 %v293
  %890 = vmatprep.subr.mxu0 0.0
  %891 = vmatpush1.msra.mxu0 %v294
  %892 = vmatprep.subr.mxu0 0.0
  %893 = vmatpush1.msra.mxu0 %v295
  %894 = vmatprep.subr.mxu0 0.0
  %895 = vmatpush1.msra.mxu0 %v296
  %896 = vmatprep.subr.mxu0 0.0
  %897 = vmatpush1.msra.mxu0 0.0
  %898 = vmatprep.subr.mxu0 0.0
  %899 = vmatpush1.msra.mxu0 0.0
  %900 = vmatprep.subr.mxu0 0.0
  %901 = vmatpush1.msra.mxu0 0.0
  %902 = vmatprep.subr.mxu0 0.0
  %903 = vmatpush1.msra.mxu0 0.0
  %904 = vmatprep.subr.mxu0 0.0
  %905 = vmatpush1.msra.mxu0 0.0
  %906 = vmatprep.subr.mxu0 0.0
  %907 = vmatpush1.msra.mxu0 0.0
  %908 = vmatprep.subr.mxu0 0.0
  %909 = vmatpush1.msra.mxu0 0.0
  %910 = vmatprep.subr.mxu0 0.0
  %911 = vmatpush1.msra.mxu0 0.0
  %912 = vmatprep.subr.mxu0 0.0
  %913 = vmatpush1.msra.mxu0 0.0
  %914 = vmatprep.subr.mxu0 0.0
  %915 = vmatpush1.msra.mxu0 0.0
  %916 = vmatprep.subr.mxu0 0.0
  %917 = vmatpush1.msra.mxu0 0.0
  %918 = vmatprep.subr.mxu0 0.0
  %919 = vmatpush1.msra.mxu0 0.0
  %920 = vmatprep.subr.mxu0 0.0
  %921 = vmatpush1.msra.mxu0 0.0
  %922 = vmatprep.subr.mxu0 0.0
  %923 = vmatpush1.msra.mxu0 0.0
  %924 = vmatprep.subr.mxu0 0.0
  %925 = vmatpush1.msra.mxu0 0.0
  %926 = vmatprep.subr.mxu0 0.0
  %927 = vmatpush1.msra.mxu0 0.0
  %928 = vmatprep.subr.mxu0 0.0
  %929 = vmatpush1.msra.mxu0 0.0
  %930 = vmatprep.subr.mxu0 0.0
  %931 = vmatpush1.msra.mxu0 0.0
  %932 = vmatprep.subr.mxu0 0.0
  %933 = vmatpush1.msra.mxu0 0.0
  %934 = vmatprep.subr.mxu0 0.0
  %935 = vmatpush1.msra.mxu0 0.0
  %936 = vmatprep.subr.mxu0 0.0
  %937 = vmatpush1.msra.mxu0 0.0
  %938 = vmatprep.subr.mxu0 0.0
  %939 = vmatpush1.msra.mxu0 0.0
  %940 = vmatprep.subr.mxu0 0.0
  %941 = vmatpush1.msra.mxu0 0.0
  %942 = vmatprep.subr.mxu0 0.0
  %943 = vmatpush1.msra.mxu0 0.0
  %944 = vmatprep.subr.mxu0 0.0
  %945 = vmatpush1.msra.mxu0 0.0
  %946 = vmatprep.subr.mxu0 0.0
  %947 = vmatpush1.msra.mxu0 0.0
  %948 = vmatprep.subr.mxu0 0.0
  %949 = vmatpush1.msra.mxu0 0.0
  %950 = vmatprep.subr.mxu0 0.0
  %951 = vmatpush1.msra.mxu0 0.0
  %952 = vmatprep.mubr.f32.mxu0 0.0
  %953 = vmatmul.mubr.f32.gmra.mrb[0].mxu0 %v886
  %v954 = vpop.f32.mrb[0].mxu0
  %v955 = vadd.f32 0.0, %v954
  %v956 = vpop.f32.mrb[0].mxu0
  %957 = vdwg.mxu0
  %v958 = vadd.f32 %v882, %v955
  %v959 = vrot.slane %v137, 2
  %v960 = vsel %vm148, %v959, 0
  %962 = vmatprep.subr.mxu0 0.0
  %963 = vmatpush1.msra.mxu0 %v371
  %964 = vmatprep.subr.mxu0 0.0
  %965 = vmatpush1.msra.mxu0 %v372
  %966 = vmatprep.subr.mxu0 0.0
  %967 = vmatpush1.msra.mxu0 %v373
  %968 = vmatprep.subr.mxu0 0.0
  %969 = vmatpush1.msra.mxu0 %v374
  %970 = vmatprep.subr.mxu0 0.0
  %971 = vmatpush1.msra.mxu0 0.0
  %972 = vmatprep.subr.mxu0 0.0
  %973 = vmatpush1.msra.mxu0 0.0
  %974 = vmatprep.subr.mxu0 0.0
  %975 = vmatpush1.msra.mxu0 0.0
  %976 = vmatprep.subr.mxu0 0.0
  %977 = vmatpush1.msra.mxu0 0.0
  %978 = vmatprep.subr.mxu0 0.0
  %979 = vmatpush1.msra.mxu0 0.0
  %980 = vmatprep.subr.mxu0 0.0
  %981 = vmatpush1.msra.mxu0 0.0
  %982 = vmatprep.subr.mxu0 0.0
  %983 = vmatpush1.msra.mxu0 0.0
  %984 = vmatprep.subr.mxu0 0.0
  %985 = vmatpush1.msra.mxu0 0.0
  %986 = vmatprep.subr.mxu0 0.0
  %987 = vmatpush1.msra.mxu0 0.0
  %988 = vmatprep.subr.mxu0 0.0
  %989 = vmatpush1.msra.mxu0 0.0
  %990 = vmatprep.subr.mxu0 0.0
  %991 = vmatpush1.msra.mxu0 0.0
  %992 = vmatprep.subr.mxu0 0.0
  %993 = vmatpush1.msra.mxu0 0.0
  %994 = vmatprep.subr.mxu0 0.0
  %995 = vmatpush1.msra.mxu0 0.0
  %996 = vmatprep.subr.mxu0 0.0
  %997 = vmatpush1.msra.mxu0 0.0
  %998 = vmatprep.subr.mxu0 0.0
  %999 = vmatpush1.msra.mxu0 0.0
  %1000 = vmatprep.subr.mxu0 0.0
  %1001 = vmatpush1.msra.mxu0 0.0
  %1002 = vmatprep.subr.mxu0 0.0
  %1003 = vmatpush1.msra.mxu0 0.0
  %1004 = vmatprep.subr.mxu0 0.0
  %1005 = vmatpush1.msra.mxu0 0.0
  %1006 = vmatprep.subr.mxu0 0.0
  %1007 = vmatpush1.msra.mxu0 0.0
  %1008 = vmatprep.subr.mxu0 0.0
  %1009 = vmatpush1.msra.mxu0 0.0
  %1010 = vmatprep.subr.mxu0 0.0
  %1011 = vmatpush1.msra.mxu0 0.0
  %1012 = vmatprep.subr.mxu0 0.0
  %1013 = vmatpush1.msra.mxu0 0.0
  %1014 = vmatprep.subr.mxu0 0.0
  %1015 = vmatpush1.msra.mxu0 0.0
  %1016 = vmatprep.subr.mxu0 0.0
  %1017 = vmatpush1.msra.mxu0 0.0
  %1018 = vmatprep.subr.mxu0 0.0
  %1019 = vmatpush1.msra.mxu0 0.0
  %1020 = vmatprep.subr.mxu0 0.0
  %1021 = vmatpush1.msra.mxu0 0.0
  %1022 = vmatprep.subr.mxu0 0.0
  %1023 = vmatpush1.msra.mxu0 0.0
  %1024 = vmatprep.subr.mxu0 0.0
  %1025 = vmatpush1.msra.mxu0 0.0
  %1026 = vmatprep.mubr.f32.mxu0 0.0
  %1027 = vmatmul.mubr.f32.gmra.mrb[0].mxu0 %v960
  %v1028 = vpop.f32.mrb[0].mxu0
  %v1029 = vadd.f32 0.0, %v1028
  %v1030 = vpop.f32.mrb[0].mxu0
  %1031 = vdwg.mxu0
  %v1032 = vadd.f32 %v958, %v1029
  %v1033 = vadd.f32 %v1032, %v452
  %v1034 = vmax.f32 %v1033, 0.0
  %v1035 = vld [vmem:[%s1 + $0xa8] sm:$0xff]
  %v1036 = vld [vmem:[%s1 + $0xb0] sm:$0xff]
  %v1037 = vld [vmem:[%s1 + $0xb8] sm:$0xff]
  %v1038 = vld [vmem:[%s1 + $0xc0] sm:$0xff]
  %v1039 = vld [vmem:[%s1 + $0xc8] sm:$0xff]
  %v1040 = vld [vmem:[%s1 + $0xd0] sm:$0xff]
  %v1041 = vld [vmem:[%s1 + $0xd8] sm:$0xff]
  %v1042 = vld [vmem:[%s1 + $0xe0] sm:$0xff]
  %v1043 = vld [vmem:[%s1 + $0xe8] sm:$0xff]
  %v1044 = vld [vmem:[%s1 + $0xf0] sm:$0xff]
  %v1045 = vld [vmem:[%s1 + $0xf8] sm:$0xff]
  %v1046 = vld [vmem:[%s1 + $0x100] sm:$0xff]
  %v1047 = vld [vmem:[%s1 + $0x108] sm:$0xff]
  %v1048 = vld [vmem:[%s1 + $0x110] sm:$0xff]
  %v1049 = vld [vmem:[%s1 + $0x118] sm:$0xff]
  %v1050 = vld [vmem:[%s1 + $0x120] sm:$0xff]
  %v1052 = vrot.slane %v454, 2
  %vm1053 = vcmask 523264
  %v1054 = vsel %vm1053, %v1052, 0
  %1056 = vmatprep.subr.mxu0 0.0
  %1057 = vmatpush1.msra.mxu0 %v1043
  %1058 = vmatprep.subr.mxu0 0.0
  %1059 = vmatpush1.msra.mxu0 %v1044
  %1060 = vmatprep.subr.mxu0 0.0
  %1061 = vmatpush1.msra.mxu0 %v1045
  %1062 = vmatprep.subr.mxu0 0.0
  %1063 = vmatpush1.msra.mxu0 %v1046
  %1064 = vmatprep.subr.mxu0 0.0
  %1065 = vmatpush1.msra.mxu0 %v1047
  %1066 = vmatprep.subr.mxu0 0.0
  %1067 = vmatpush1.msra.mxu0 %v1048
  %1068 = vmatprep.subr.mxu0 0.0
  %1069 = vmatpush1.msra.mxu0 %v1049
  %1070 = vmatprep.subr.mxu0 0.0
  %1071 = vmatpush1.msra.mxu0 %v1050
  %1072 = vmatprep.subr.mxu0 0.0
  %1073 = vmatpush1.msra.mxu0 0.0
  %1074 = vmatprep.subr.mxu0 0.0
  %1075 = vmatpush1.msra.mxu0 0.0
  %1076 = vmatprep.subr.mxu0 0.0
  %1077 = vmatpush1.msra.mxu0 0.0
  %1078 = vmatprep.subr.mxu0 0.0
  %1079 = vmatpush1.msra.mxu0 0.0
  %1080 = vmatprep.subr.mxu0 0.0
  %1081 = vmatpush1.msra.mxu0 0.0
  %1082 = vmatprep.subr.mxu0 0.0
  %1083 = vmatpush1.msra.mxu0 0.0
  %1084 = vmatprep.subr.mxu0 0.0
  %1085 = vmatpush1.msra.mxu0 0.0
  %1086 = vmatprep.subr.mxu0 0.0
  %1087 = vmatpush1.msra.mxu0 0.0
  %1088 = vmatprep.subr.mxu0 0.0
  %1089 = vmatpush1.msra.mxu0 0.0
  %1090 = vmatprep.subr.mxu0 0.0
  %1091 = vmatpush1.msra.mxu0 0.0
  %1092 = vmatprep.subr.mxu0 0.0
  %1093 = vmatpush1.msra.mxu0 0.0
  %1094 = vmatprep.subr.mxu0 0.0
  %1095 = vmatpush1.msra.mxu0 0.0
  %1096 = vmatprep.subr.mxu0 0.0
  %1097 = vmatpush1.msra.mxu0 0.0
  %1098 = vmatprep.subr.mxu0 0.0
  %1099 = vmatpush1.msra.mxu0 0.0
  %1100 = vmatprep.subr.mxu0 0.0
  %1101 = vmatpush1.msra.mxu0 0.0
  %1102 = vmatprep.subr.mxu0 0.0
  %1103 = vmatpush1.msra.mxu0 0.0
  %1104 = vmatprep.subr.mxu0 0.0
  %1105 = vmatpush1.msra.mxu0 0.0
  %1106 = vmatprep.subr.mxu0 0.0
  %1107 = vmatpush1.msra.mxu0 0.0
  %1108 = vmatprep.subr.mxu0 0.0
  %1109 = vmatpush1.msra.mxu0 0.0
  %1110 = vmatprep.subr.mxu0 0.0
  %1111 = vmatpush1.msra.mxu0 0.0
  %1112 = vmatprep.subr.mxu0 0.0
  %1113 = vmatpush1.msra.mxu0 0.0
  %1114 = vmatprep.subr.mxu0 0.0
  %1115 = vmatpush1.msra.mxu0 0.0
  %1116 = vmatprep.subr.mxu0 0.0
  %1117 = vmatpush1.msra.mxu0 0.0
  %1118 = vmatprep.subr.mxu0 0.0
  %1119 = vmatpush1.msra.mxu0 0.0
  %1120 = vmatprep.mubr.f32.mxu0 0.0
  %1121 = vmatmul.mubr.f32.gmra.mrb[0].mxu0 %v1054
  %v1122 = vpop.f32.mrb[0].mxu0
  %v1123 = vadd.f32 0.0, %v1122
  %v1124 = vpop.f32.mrb[0].mxu0
  %1125 = vdwg.mxu0
  %v1126 = vsel %vm1053, %v454, 0
  %1128 = vmatprep.subr.mxu0 0.0
  %1129 = vmatpush1.msra.mxu0 %v1035
  %1130 = vmatprep.subr.mxu0 0.0
  %1131 = vmatpush1.msra.mxu0 %v1036
  %1132 = vmatprep.subr.mxu0 0.0
  %1133 = vmatpush1.msra.mxu0 %v1037
  %1134 = vmatprep.subr.mxu0 0.0
  %1135 = vmatpush1.msra.mxu0 %v1038
  %1136 = vmatprep.subr.mxu0 0.0
  %1137 = vmatpush1.msra.mxu0 %v1039
  %1138 = vmatprep.subr.mxu0 0.0
  %1139 = vmatpush1.msra.mxu0 %v1040
  %1140 = vmatprep.subr.mxu0 0.0
  %1141 = vmatpush1.msra.mxu0 %v1041
  %1142 = vmatprep.subr.mxu0 0.0
  %1143 = vmatpush1.msra.mxu0 %v1042
  %1144 = vmatprep.subr.mxu0 0.0
  %1145 = vmatpush1.msra.mxu0 0.0
  %1146 = vmatprep.subr.mxu0 0.0
  %1147 = vmatpush1.msra.mxu0 0.0
  %1148 = vmatprep.subr.mxu0 0.0
  %1149 = vmatpush1.msra.mxu0 0.0
  %1150 = vmatprep.subr.mxu0 0.0
  %1151 = vmatpush1.msra.mxu0 0.0
  %1152 = vmatprep.subr.mxu0 0.0
  %1153 = vmatpush1.msra.mxu0 0.0
  %1154 = vmatprep.subr.mxu0 0.0
  %1155 = vmatpush1.msra.mxu0 0.0
  %1156 = vmatprep.subr.mxu0 0.0
  %1157 = vmatpush1.msra.mxu0 0.0
  %1158 = vmatprep.subr.mxu0 0.0
  %1159 = vmatpush1.msra.mxu0 0.0
  %1160 = vmatprep.subr.mxu0 0.0
  %1161 = vmatpush1.msra.mxu0 0.0
  %1162 = vmatprep.subr.mxu0 0.0
  %1163 = vmatpush1.msra.mxu0 0.0
  %1164 = vmatprep.subr.mxu0 0.0
  %1165 = vmatpush1.msra.mxu0 0.0
  %1166 = vmatprep.subr.mxu0 0.0
  %1167 = vmatpush1.msra.mxu0 0.0
  %1168 = vmatprep.subr.mxu0 0.0
  %1169 = vmatpush1.msra.mxu0 0.0
  %1170 = vmatprep.subr.mxu0 0.0
  %1171 = vmatpush1.msra.mxu0 0.0
  %1172 = vmatprep.subr.mxu0 0.0
  %1173 = vmatpush1.msra.mxu0 0.0
  %1174 = vmatprep.subr.mxu0 0.0
  %1175 = vmatpush1.msra.mxu0 0.0
  %1176 = vmatprep.subr.mxu0 0.0
  %1177 = vmatpush1.msra.mxu0 0.0
  %1178 = vmatprep.subr.mxu0 0.0
  %1179 = vmatpush1.msra.mxu0 0.0
  %1180 = vmatprep.subr.mxu0 0.0
  %1181 = vmatpush1.msra.mxu0 0.0
  %1182 = vmatprep.subr.mxu0 0.0
  %1183 = vmatpush1.msra.mxu0 0.0
  %1184 = vmatprep.subr.mxu0 0.0
  %1185 = vmatpush1.msra.mxu0 0.0
  %1186 = vmatprep.subr.mxu0 0.0
  %1187 = vmatpush1.msra.mxu0 0.0
  %1188 = vmatprep.subr.mxu0 0.0
  %1189 = vmatpush1.msra.mxu0 0.0
  %1190 = vmatprep.subr.mxu0 0.0
  %1191 = vmatpush1.msra.mxu0 0.0
  %1192 = vmatprep.mubr.f32.mxu0 0.0
  %1193 = vmatmul.mubr.f32.gmra.mrb[0].mxu0 %v1126
  %v1194 = vpop.f32.mrb[0].mxu0
  %v1195 = vadd.f32 %v1123, %v1194
  %v1196 = vpop.f32.mrb[0].mxu0
  %1197 = vdwg.mxu0
  %v1198 = vld [vmem:[%s1 + $0x128] sm:$0xff]
  %v1199 = vld [vmem:[%s1 + $0x130] sm:$0xff]
  %v1200 = vld [vmem:[%s1 + $0x138] sm:$0xff]
  %v1201 = vld [vmem:[%s1 + $0x140] sm:$0xff]
  %v1202 = vld [vmem:[%s1 + $0x148] sm:$0xff]
  %v1203 = vld [vmem:[%s1 + $0x150] sm:$0xff]
  %v1204 = vld [vmem:[%s1 + $0x158] sm:$0xff]
  %v1205 = vld [vmem:[%s1 + $0x160] sm:$0xff]
  %v1207 = vsel %vm1053, %v744, 0
  %1209 = vmatprep.subr.mxu0 0.0
  %1210 = vmatpush1.msra.mxu0 %v1198
  %1211 = vmatprep.subr.mxu0 0.0
  %1212 = vmatpush1.msra.mxu0 %v1199
  %1213 = vmatprep.subr.mxu0 0.0
  %1214 = vmatpush1.msra.mxu0 %v1200
  %1215 = vmatprep.subr.mxu0 0.0
  %1216 = vmatpush1.msra.mxu0 %v1201
  %1217 = vmatprep.subr.mxu0 0.0
  %1218 = vmatpush1.msra.mxu0 %v1202
  %1219 = vmatprep.subr.mxu0 0.0
  %1220 = vmatpush1.msra.mxu0 %v1203
  %1221 = vmatprep.subr.mxu0 0.0
  %1222 = vmatpush1.msra.mxu0 %v1204
  %1223 = vmatprep.subr.mxu0 0.0
  %1224 = vmatpush1.msra.mxu0 %v1205
  %1225 = vmatprep.subr.mxu0 0.0
  %1226 = vmatpush1.msra.mxu0 0.0
  %1227 = vmatprep.subr.mxu0 0.0
  %1228 = vmatpush1.msra.mxu0 0.0
  %1229 = vmatprep.subr.mxu0 0.0
  %1230 = vmatpush1.msra.mxu0 0.0
  %1231 = vmatprep.subr.mxu0 0.0
  %1232 = vmatpush1.msra.mxu0 0.0
  %1233 = vmatprep.subr.mxu0 0.0
  %1234 = vmatpush1.msra.mxu0 0.0
  %1235 = vmatprep.subr.mxu0 0.0
  %1236 = vmatpush1.msra.mxu0 0.0
  %1237 = vmatprep.subr.mxu0 0.0
  %1238 = vmatpush1.msra.mxu0 0.0
  %1239 = vmatprep.subr.mxu0 0.0
  %1240 = vmatpush1.msra.mxu0 0.0
  %1241 = vmatprep.subr.mxu0 0.0
  %1242 = vmatpush1.msra.mxu0 0.0
  %1243 = vmatprep.subr.mxu0 0.0
  %1244 = vmatpush1.msra.mxu0 0.0
  %1245 = vmatprep.subr.mxu0 0.0
  %1246 = vmatpush1.msra.mxu0 0.0
  %1247 = vmatprep.subr.mxu0 0.0
  %1248 = vmatpush1.msra.mxu0 0.0
  %1249 = vmatprep.subr.mxu0 0.0
  %1250 = vmatpush1.msra.mxu0 0.0
  %1251 = vmatprep.subr.mxu0 0.0
  %1252 = vmatpush1.msra.mxu0 0.0
  %1253 = vmatprep.subr.mxu0 0.0
  %1254 = vmatpush1.msra.mxu0 0.0
  %1255 = vmatprep.subr.mxu0 0.0
  %1256 = vmatpush1.msra.mxu0 0.0
  %1257 = vmatprep.subr.mxu0 0.0
  %1258 = vmatpush1.msra.mxu0 0.0
  %1259 = vmatprep.subr.mxu0 0.0
  %1260 = vmatpush1.msra.mxu0 0.0
  %1261 = vmatprep.subr.mxu0 0.0
  %1262 = vmatpush1.msra.mxu0 0.0
  %1263 = vmatprep.subr.mxu0 0.0
  %1264 = vmatpush1.msra.mxu0 0.0
  %1265 = vmatprep.subr.mxu0 0.0
  %1266 = vmatpush1.msra.mxu0 0.0
  %1267 = vmatprep.subr.mxu0 0.0
  %1268 = vmatpush1.msra.mxu0 0.0
  %1269 = vmatprep.subr.mxu0 0.0
  %1270 = vmatpush1.msra.mxu0 0.0
  %1271 = vmatprep.subr.mxu0 0.0
  %1272 = vmatpush1.msra.mxu0 0.0
  %1273 = vmatprep.mubr.f32.mxu0 0.0
  %1274 = vmatmul.mubr.f32.gmra.mrb[0].mxu0 %v1207
  %v1275 = vpop.f32.mrb[0].mxu0
  %v1276 = vadd.f32 0.0, %v1275
  %v1277 = vpop.f32.mrb[0].mxu0
  %1278 = vdwg.mxu0
  %v1279 = vadd.f32 %v1195, %v1276
  %v1280 = vld [vmem:[%s1 + $0x168] sm:$0xff]
  %v1281 = vld [vmem:[%s1 + $0x170] sm:$0xff]
  %v1282 = vld [vmem:[%s1 + $0x178] sm:$0xff]
  %v1283 = vld [vmem:[%s1 + $0x180] sm:$0xff]
  %v1284 = vld [vmem:[%s1 + $0x188] sm:$0xff]
  %v1285 = vld [vmem:[%s1 + $0x190] sm:$0xff]
  %v1286 = vld [vmem:[%s1 + $0x198] sm:$0xff]
  %v1287 = vld [vmem:[%s1 + $0x1a0] sm:$0xff]
  %v1288 = vrot.slane %v744, 2
  %v1289 = vsel %vm1053, %v1288, 0
  %1291 = vmatprep.subr.mxu0 0.0
  %1292 = vmatpush1.msra.mxu0 %v1280
  %1293 = vmatprep.subr.mxu0 0.0
  %1294 = vmatpush1.msra.mxu0 %v1281
  %1295 = vmatprep.subr.mxu0 0.0
  %1296 = vmatpush1.msra.mxu0 %v1282
  %1297 = vmatprep.subr.mxu0 0.0
  %1298 = vmatpush1.msra.mxu0 %v1283
  %1299 = vmatprep.subr.mxu0 0.0
  %1300 = vmatpush1.msra.mxu0 %v1284
  %1301 = vmatprep.subr.mxu0 0.0
  %1302 = vmatpush1.msra.mxu0 %v1285
  %1303 = vmatprep.subr.mxu0 0.0
  %1304 = vmatpush1.msra.mxu0 %v1286
  %1305 = vmatprep.subr.mxu0 0.0
  %1306 = vmatpush1.msra.mxu0 %v1287
  %1307 = vmatprep.subr.mxu0 0.0
  %1308 = vmatpush1.msra.mxu0 0.0
  %1309 = vmatprep.subr.mxu0 0.0
  %1310 = vmatpush1.msra.mxu0 0.0
  %1311 = vmatprep.subr.mxu0 0.0
  %1312 = vmatpush1.msra.mxu0 0.0
  %1313 = vmatprep.subr.mxu0 0.0
  %1314 = vmatpush1.msra.mxu0 0.0
  %1315 = vmatprep.subr.mxu0 0.0
  %1316 = vmatpush1.msra.mxu0 0.0
  %1317 = vmatprep.subr.mxu0 0.0
  %1318 = vmatpush1.msra.mxu0 0.0
  %1319 = vmatprep.subr.mxu0 0.0
  %1320 = vmatpush1.msra.mxu0 0.0
  %1321 = vmatprep.subr.mxu0 0.0
  %1322 = vmatpush1.msra.mxu0 0.0
  %1323 = vmatprep.subr.mxu0 0.0
  %1324 = vmatpush1.msra.mxu0 0.0
  %1325 = vmatprep.subr.mxu0 0.0
  %1326 = vmatpush1.msra.mxu0 0.0
  %1327 = vmatprep.subr.mxu0 0.0
  %1328 = vmatpush1.msra.mxu0 0.0
  %1329 = vmatprep.subr.mxu0 0.0
  %1330 = vmatpush1.msra.mxu0 0.0
  %1331 = vmatprep.subr.mxu0 0.0
  %1332 = vmatpush1.msra.mxu0 0.0
  %1333 = vmatprep.subr.mxu0 0.0
  %1334 = vmatpush1.msra.mxu0 0.0
  %1335 = vmatprep.subr.mxu0 0.0
  %1336 = vmatpush1.msra.mxu0 0.0
  %1337 = vmatprep.subr.mxu0 0.0
  %1338 = vmatpush1.msra.mxu0 0.0
  %1339 = vmatprep.subr.mxu0 0.0
  %1340 = vmatpush1.msra.mxu0 0.0
  %1341 = vmatprep.subr.mxu0 0.0
  %1342 = vmatpush1.msra.mxu0 0.0
  %1343 = vmatprep.subr.mxu0 0.0
  %1344 = vmatpush1.msra.mxu0 0.0
  %1345 = vmatprep.subr.mxu0 0.0
  %1346 = vmatpush1.msra.mxu0 0.0
  %1347 = vmatprep.subr.mxu0 0.0
  %1348 = vmatpush1.msra.mxu0 0.0
  %1349 = vmatprep.subr.mxu0 0.0
  %1350 = vmatpush1.msra.mxu0 0.0
  %1351 = vmatprep.subr.mxu0 0.0
  %1352 = vmatpush1.msra.mxu0 0.0
  %1353 = vmatprep.subr.mxu0 0.0
  %1354 = vmatpush1.msra.mxu0 0.0
  %1355 = vmatprep.mubr.f32.mxu0 0.0
  %1356 = vmatmul.mubr.f32.gmra.mrb[0].mxu0 %v1289
  %v1357 = vpop.f32.mrb[0].mxu0
  %v1358 = vadd.f32 0.0, %v1357
  %v1359 = vpop.f32.mrb[0].mxu0
  %1360 = vdwg.mxu0
  %v1361 = vadd.f32 %v1279, %v1358
  %v1362 = vlaneseq
  %v1363 = vshrl.u32 %v1362, 7
  %v1364 = vsub.s32 0, %v1363
  %v1365 = vrot.slane %v16, %v1364
  %v1366 = vadd.f32 %v1361, %v1365
  %v1367 = vmax.f32 %v1366, 0.0
  %1368 = vmatprep.subr.mxu0 0.0
  %1369 = vmatpush1.msra.mxu0 %v1043
  %1370 = vmatprep.subr.mxu0 0.0
  %1371 = vmatpush1.msra.mxu0 %v1044
  %1372 = vmatprep.subr.mxu0 0.0
  %1373 = vmatpush1.msra.mxu0 %v1045
  %1374 = vmatprep.subr.mxu0 0.0
  %1375 = vmatpush1.msra.mxu0 %v1046
  %1376 = vmatprep.subr.mxu0 0.0
  %1377 = vmatpush1.msra.mxu0 %v1047
  %1378 = vmatprep.subr.mxu0 0.0
  %1379 = vmatpush1.msra.mxu0 %v1048
  %1380 = vmatprep.subr.mxu0 0.0
  %1381 = vmatpush1.msra.mxu0 %v1049
  %1382 = vmatprep.subr.mxu0 0.0
  %1383 = vmatpush1.msra.mxu0 %v1050
  %1384 = vmatprep.subr.mxu0 0.0
  %1385 = vmatpush1.msra.mxu0 0.0
  %1386 = vmatprep.subr.mxu0 0.0
  %1387 = vmatpush1.msra.mxu0 0.0
  %1388 = vmatprep.subr.mxu0 0.0
  %1389 = vmatpush1.msra.mxu0 0.0
  %1390 = vmatprep.subr.mxu0 0.0
  %1391 = vmatpush1.msra.mxu0 0.0
  %1392 = vmatprep.subr.mxu0 0.0
  %1393 = vmatpush1.msra.mxu0 0.0
  %1394 = vmatprep.subr.mxu0 0.0
  %1395 = vmatpush1.msra.mxu0 0.0
  %1396 = vmatprep.subr.mxu0 0.0
  %1397 = vmatpush1.msra.mxu0 0.0
  %1398 = vmatprep.subr.mxu0 0.0
  %1399 = vmatpush1.msra.mxu0 0.0
  %1400 = vmatprep.subr.mxu0 0.0
  %1401 = vmatpush1.msra.mxu0 0.0
  %1402 = vmatprep.subr.mxu0 0.0
  %1403 = vmatpush1.msra.mxu0 0.0
  %1404 = vmatprep.subr.mxu0 0.0
  %1405 = vmatpush1.msra.mxu0 0.0
  %1406 = vmatprep.subr.mxu0 0.0
  %1407 = vmatpush1.msra.mxu0 0.0
  %1408 = vmatprep.subr.mxu0 0.0
  %1409 = vmatpush1.msra.mxu0 0.0
  %1410 = vmatprep.subr.mxu0 0.0
  %1411 = vmatpush1.msra.mxu0 0.0
  %1412 = vmatprep.subr.mxu0 0.0
  %1413 = vmatpush1.msra.mxu0 0.0
  %1414 = vmatprep.subr.mxu0 0.0
  %1415 = vmatpush1.msra.mxu0 0.0
  %1416 = vmatprep.subr.mxu0 0.0
  %1417 = vmatpush1.msra.mxu0 0.0
  %1418 = vmatprep.subr.mxu0 0.0
  %1419 = vmatpush1.msra.mxu0 0.0
  %1420 = vmatprep.subr.mxu0 0.0
  %1421 = vmatpush1.msra.mxu0 0.0
  %1422 = vmatprep.subr.mxu0 0.0
  %1423 = vmatpush1.msra.mxu0 0.0
  %1424 = vmatprep.subr.mxu0 0.0
  %1425 = vmatpush1.msra.mxu0 0.0
  %1426 = vmatprep.subr.mxu0 0.0
  %1427 = vmatpush1.msra.mxu0 0.0
  %1428 = vmatprep.subr.mxu0 0.0
  %1429 = vmatpush1.msra.mxu0 0.0
  %1430 = vmatprep.subr.mxu0 0.0
  %1431 = vmatpush1.msra.mxu0 0.0
  %1432 = vmatprep.mubr.f32.mxu0 0.0
  %1433 = vmatmul.mubr.f32.gmra.mrb[0].mxu0 %v1289
  %v1434 = vpop.f32.mrb[0].mxu0
  %v1435 = vadd.f32 0.0, %v1434
  %v1436 = vpop.f32.mrb[0].mxu0
  %1437 = vdwg.mxu0
  %1438 = vmatprep.subr.mxu0 0.0
  %1439 = vmatpush1.msra.mxu0 %v1035
  %1440 = vmatprep.subr.mxu0 0.0
  %1441 = vmatpush1.msra.mxu0 %v1036
  %1442 = vmatprep.subr.mxu0 0.0
  %1443 = vmatpush1.msra.mxu0 %v1037
  %1444 = vmatprep.subr.mxu0 0.0
  %1445 = vmatpush1.msra.mxu0 %v1038
  %1446 = vmatprep.subr.mxu0 0.0
  %1447 = vmatpush1.msra.mxu0 %v1039
  %1448 = vmatprep.subr.mxu0 0.0
  %1449 = vmatpush1.msra.mxu0 %v1040
  %1450 = vmatprep.subr.mxu0 0.0
  %1451 = vmatpush1.msra.mxu0 %v1041
  %1452 = vmatprep.subr.mxu0 0.0
  %1453 = vmatpush1.msra.mxu0 %v1042
  %1454 = vmatprep.subr.mxu0 0.0
  %1455 = vmatpush1.msra.mxu0 0.0
  %1456 = vmatprep.subr.mxu0 0.0
  %1457 = vmatpush1.msra.mxu0 0.0
  %1458 = vmatprep.subr.mxu0 0.0
  %1459 = vmatpush1.msra.mxu0 0.0
  %1460 = vmatprep.subr.mxu0 0.0
  %1461 = vmatpush1.msra.mxu0 0.0
  %1462 = vmatprep.subr.mxu0 0.0
  %1463 = vmatpush1.msra.mxu0 0.0
  %1464 = vmatprep.subr.mxu0 0.0
  %1465 = vmatpush1.msra.mxu0 0.0
  %1466 = vmatprep.subr.mxu0 0.0
  %1467 = vmatpush1.msra.mxu0 0.0
  %1468 = vmatprep.subr.mxu0 0.0
  %1469 = vmatpush1.msra.mxu0 0.0
  %1470 = vmatprep.subr.mxu0 0.0
  %1471 = vmatpush1.msra.mxu0 0.0
  %1472 = vmatprep.subr.mxu0 0.0
  %1473 = vmatpush1.msra.mxu0 0.0
  %1474 = vmatprep.subr.mxu0 0.0
  %1475 = vmatpush1.msra.mxu0 0.0
  %1476 = vmatprep.subr.mxu0 0.0
  %1477 = vmatpush1.msra.mxu0 0.0
  %1478 = vmatprep.subr.mxu0 0.0
  %1479 = vmatpush1.msra.mxu0 0.0
  %1480 = vmatprep.subr.mxu0 0.0
  %1481 = vmatpush1.msra.mxu0 0.0
  %1482 = vmatprep.subr.mxu0 0.0
  %1483 = vmatpush1.msra.mxu0 0.0
  %1484 = vmatprep.subr.mxu0 0.0
  %1485 = vmatpush1.msra.mxu0 0.0
  %1486 = vmatprep.subr.mxu0 0.0
  %1487 = vmatpush1.msra.mxu0 0.0
  %1488 = vmatprep.subr.mxu0 0.0
  %1489 = vmatpush1.msra.mxu0 0.0
  %1490 = vmatprep.subr.mxu0 0.0
  %1491 = vmatpush1.msra.mxu0 0.0
  %1492 = vmatprep.subr.mxu0 0.0
  %1493 = vmatpush1.msra.mxu0 0.0
  %1494 = vmatprep.subr.mxu0 0.0
  %1495 = vmatpush1.msra.mxu0 0.0
  %1496 = vmatprep.subr.mxu0 0.0
  %1497 = vmatpush1.msra.mxu0 0.0
  %1498 = vmatprep.subr.mxu0 0.0
  %1499 = vmatpush1.msra.mxu0 0.0
  %1500 = vmatprep.subr.mxu0 0.0
  %1501 = vmatpush1.msra.mxu0 0.0
  %1502 = vmatprep.mubr.f32.mxu0 0.0
  %1503 = vmatmul.mubr.f32.gmra.mrb[0].mxu0 %v1207
  %v1504 = vpop.f32.mrb[0].mxu0
  %v1505 = vadd.f32 %v1435, %v1504
  %v1506 = vpop.f32.mrb[0].mxu0
  %1507 = vdwg.mxu0
  %v1509 = vsel %vm1053, %v1034, 0
  %1511 = vmatprep.subr.mxu0 0.0
  %1512 = vmatpush1.msra.mxu0 %v1198
  %1513 = vmatprep.subr.mxu0 0.0
  %1514 = vmatpush1.msra.mxu0 %v1199
  %1515 = vmatprep.subr.mxu0 0.0
  %1516 = vmatpush1.msra.mxu0 %v1200
  %1517 = vmatprep.subr.mxu0 0.0
  %1518 = vmatpush1.msra.mxu0 %v1201
  %1519 = vmatprep.subr.mxu0 0.0
  %1520 = vmatpush1.msra.mxu0 %v1202
  %1521 = vmatprep.subr.mxu0 0.0
  %1522 = vmatpush1.msra.mxu0 %v1203
  %1523 = vmatprep.subr.mxu0 0.0
  %1524 = vmatpush1.msra.mxu0 %v1204
  %1525 = vmatprep.subr.mxu0 0.0
  %1526 = vmatpush1.msra.mxu0 %v1205
  %1527 = vmatprep.subr.mxu0 0.0
  %1528 = vmatpush1.msra.mxu0 0.0
  %1529 = vmatprep.subr.mxu0 0.0
  %1530 = vmatpush1.msra.mxu0 0.0
  %1531 = vmatprep.subr.mxu0 0.0
  %1532 = vmatpush1.msra.mxu0 0.0
  %1533 = vmatprep.subr.mxu0 0.0
  %1534 = vmatpush1.msra.mxu0 0.0
  %1535 = vmatprep.subr.mxu0 0.0
  %1536 = vmatpush1.msra.mxu0 0.0
  %1537 = vmatprep.subr.mxu0 0.0
  %1538 = vmatpush1.msra.mxu0 0.0
  %1539 = vmatprep.subr.mxu0 0.0
  %1540 = vmatpush1.msra.mxu0 0.0
  %1541 = vmatprep.subr.mxu0 0.0
  %1542 = vmatpush1.msra.mxu0 0.0
  %1543 = vmatprep.subr.mxu0 0.0
  %1544 = vmatpush1.msra.mxu0 0.0
  %1545 = vmatprep.subr.mxu0 0.0
  %1546 = vmatpush1.msra.mxu0 0.0
  %1547 = vmatprep.subr.mxu0 0.0
  %1548 = vmatpush1.msra.mxu0 0.0
  %1549 = vmatprep.subr.mxu0 0.0
  %1550 = vmatpush1.msra.mxu0 0.0
  %1551 = vmatprep.subr.mxu0 0.0
  %1552 = vmatpush1.msra.mxu0 0.0
  %1553 = vmatprep.subr.mxu0 0.0
  %1554 = vmatpush1.msra.mxu0 0.0
  %1555 = vmatprep.subr.mxu0 0.0
  %1556 = vmatpush1.msra.mxu0 0.0
  %1557 = vmatprep.subr.mxu0 0.0
  %1558 = vmatpush1.msra.mxu0 0.0
  %1559 = vmatprep.subr.mxu0 0.0
  %1560 = vmatpush1.msra.mxu0 0.0
  %1561 = vmatprep.subr.mxu0 0.0
  %1562 = vmatpush1.msra.mxu0 0.0
  %1563 = vmatprep.subr.mxu0 0.0
  %1564 = vmatpush1.msra.mxu0 0.0
  %1565 = vmatprep.subr.mxu0 0.0
  %1566 = vmatpush1.msra.mxu0 0.0
  %1567 = vmatprep.subr.mxu0 0.0
  %1568 = vmatpush1.msra.mxu0 0.0
  %1569 = vmatprep.subr.mxu0 0.0
  %1570 = vmatpush1.msra.mxu0 0.0
  %1571 = vmatprep.subr.mxu0 0.0
  %1572 = vmatpush1.msra.mxu0 0.0
  %1573 = vmatprep.subr.mxu0 0.0
  %1574 = vmatpush1.msra.mxu0 0.0
  %1575 = vmatprep.mubr.f32.mxu0 0.0
  %1576 = vmatmul.mubr.f32.gmra.mrb[0].mxu0 %v1509
  %v1577 = vpop.f32.mrb[0].mxu0
  %v1578 = vadd.f32 0.0, %v1577
  %v1579 = vpop.f32.mrb[0].mxu0
  %1580 = vdwg.mxu0
  %v1581 = vadd.f32 %v1505, %v1578
  %v1582 = vrot.slane %v1034, 2
  %v1583 = vsel %vm1053, %v1582, 0
  %1585 = vmatprep.subr.mxu0 0.0
  %1586 = vmatpush1.msra.mxu0 %v1280
  %1587 = vmatprep.subr.mxu0 0.0
  %1588 = vmatpush1.msra.mxu0 %v1281
  %1589 = vmatprep.subr.mxu0 0.0
  %1590 = vmatpush1.msra.mxu0 %v1282
  %1591 = vmatprep.subr.mxu0 0.0
  %1592 = vmatpush1.msra.mxu0 %v1283
  %1593 = vmatprep.subr.mxu0 0.0
  %1594 = vmatpush1.msra.mxu0 %v1284
  %1595 = vmatprep.subr.mxu0 0.0
  %1596 = vmatpush1.msra.mxu0 %v1285
  %1597 = vmatprep.subr.mxu0 0.0
  %1598 = vmatpush1.msra.mxu0 %v1286
  %1599 = vmatprep.subr.mxu0 0.0
  %1600 = vmatpush1.msra.mxu0 %v1287
  %1601 = vmatprep.subr.mxu0 0.0
  %1602 = vmatpush1.msra.mxu0 0.0
  %1603 = vmatprep.subr.mxu0 0.0
  %1604 = vmatpush1.msra.mxu0 0.0
  %1605 = vmatprep.subr.mxu0 0.0
  %1606 = vmatpush1.msra.mxu0 0.0
  %1607 = vmatprep.subr.mxu0 0.0
  %1608 = vmatpush1.msra.mxu0 0.0
  %1609 = vmatprep.subr.mxu0 0.0
  %1610 = vmatpush1.msra.mxu0 0.0
  %1611 = vmatprep.subr.mxu0 0.0
  %1612 = vmatpush1.msra.mxu0 0.0
  %1613 = vmatprep.subr.mxu0 0.0
  %1614 = vmatpush1.msra.mxu0 0.0
  %1615 = vmatprep.subr.mxu0 0.0
  %1616 = vmatpush1.msra.mxu0 0.0
  %1617 = vmatprep.subr.mxu0 0.0
  %1618 = vmatpush1.msra.mxu0 0.0
  %1619 = vmatprep.subr.mxu0 0.0
  %1620 = vmatpush1.msra.mxu0 0.0
  %1621 = vmatprep.subr.mxu0 0.0
  %1622 = vmatpush1.msra.mxu0 0.0
  %1623 = vmatprep.subr.mxu0 0.0
  %1624 = vmatpush1.msra.mxu0 0.0
  %1625 = vmatprep.subr.mxu0 0.0
  %1626 = vmatpush1.msra.mxu0 0.0
  %1627 = vmatprep.subr.mxu0 0.0
  %1628 = vmatpush1.msra.mxu0 0.0
  %1629 = vmatprep.subr.mxu0 0.0
  %1630 = vmatpush1.msra.mxu0 0.0
  %1631 = vmatprep.subr.mxu0 0.0
  %1632 = vmatpush1.msra.mxu0 0.0
  %1633 = vmatprep.subr.mxu0 0.0
  %1634 = vmatpush1.msra.mxu0 0.0
  %1635 = vmatprep.subr.mxu0 0.0
  %1636 = vmatpush1.msra.mxu0 0.0
  %1637 = vmatprep.subr.mxu0 0.0
  %1638 = vmatpush1.msra.mxu0 0.0
  %1639 = vmatprep.subr.mxu0 0.0
  %1640 = vmatpush1.msra.mxu0 0.0
  %1641 = vmatprep.subr.mxu0 0.0
  %1642 = vmatpush1.msra.mxu0 0.0
  %1643 = vmatprep.subr.mxu0 0.0
  %1644 = vmatpush1.msra.mxu0 0.0
  %1645 = vmatprep.subr.mxu0 0.0
  %1646 = vmatpush1.msra.mxu0 0.0
  %1647 = vmatprep.subr.mxu0 0.0
  %1648 = vmatpush1.msra.mxu0 0.0
  %1649 = vmatprep.mubr.f32.mxu0 0.0
  %1650 = vmatmul.mubr.f32.gmra.mrb[0].mxu0 %v1583
  %v1651 = vpop.f32.mrb[0].mxu0
  %v1652 = vadd.f32 0.0, %v1651
  %v1653 = vpop.f32.mrb[0].mxu0
  %1654 = vdwg.mxu0
  %v1655 = vadd.f32 %v1581, %v1652
  %v1656 = vadd.f32 %v1655, %v1365
  %v1657 = vmax.f32 %v1656, 0.0
  %v1658 = vld [vmem:[%s1 + $0x1a8] sm:$0xff]
  %v1659 = vld [vmem:[%s1 + $0x1b0] sm:$0xff]
  %v1660 = vld [vmem:[%s1 + $0x1b8] sm:$0xff]
  %v1661 = vld [vmem:[%s1 + $0x1c0] sm:$0xff]
  %v1662 = vld [vmem:[%s1 + $0x1c8] sm:$0xff]
  %v1663 = vld [vmem:[%s1 + $0x1d0] sm:$0xff]
  %v1664 = vld [vmem:[%s1 + $0x1d8] sm:$0xff]
  %v1665 = vld [vmem:[%s1 + $0x1e0] sm:$0xff]
  %v1666 = vld [vmem:[%s1 + $0x1e8] sm:$0xff]
  %v1667 = vld [vmem:[%s1 + $0x1f0] sm:$0xff]
  %v1668 = vld [vmem:[%s1 + $0x1f8] sm:$0xff]
  %v1669 = vld [vmem:[%s1 + $0x200] sm:$0xff]
  %v1670 = vld [vmem:[%s1 + $0x208] sm:$0xff]
  %v1671 = vld [vmem:[%s1 + $0x210] sm:$0xff]
  %v1672 = vld [vmem:[%s1 + $0x218] sm:$0xff]
  %v1673 = vld [vmem:[%s1 + $0x220] sm:$0xff]
  %v1675 = vrot.slane %v1367, 2
  %v1676 = vsel %vm1053, %v1675, 0
  %1678 = vmatprep.subr.mxu0 0.0
  %1679 = vmatpush1.msra.mxu0 %v1666
  %1680 = vmatprep.subr.mxu0 0.0
  %1681 = vmatpush1.msra.mxu0 %v1667
  %1682 = vmatprep.subr.mxu0 0.0
  %1683 = vmatpush1.msra.mxu0 %v1668
  %1684 = vmatprep.subr.mxu0 0.0
  %1685 = vmatpush1.msra.mxu0 %v1669
  %1686 = vmatprep.subr.mxu0 0.0
  %1687 = vmatpush1.msra.mxu0 %v1670
  %1688 = vmatprep.subr.mxu0 0.0
  %1689 = vmatpush1.msra.mxu0 %v1671
  %1690 = vmatprep.subr.mxu0 0.0
  %1691 = vmatpush1.msra.mxu0 %v1672
  %1692 = vmatprep.subr.mxu0 0.0
  %1693 = vmatpush1.msra.mxu0 %v1673
  %1694 = vmatprep.subr.mxu0 0.0
  %1695 = vmatpush1.msra.mxu0 0.0
  %1696 = vmatprep.subr.mxu0 0.0
  %1697 = vmatpush1.msra.mxu0 0.0
  %1698 = vmatprep.subr.mxu0 0.0
  %1699 = vmatpush1.msra.mxu0 0.0
  %1700 = vmatprep.subr.mxu0 0.0
  %1701 = vmatpush1.msra.mxu0 0.0
  %1702 = vmatprep.subr.mxu0 0.0
  %1703 = vmatpush1.msra.mxu0 0.0
  %1704 = vmatprep.subr.mxu0 0.0
  %1705 = vmatpush1.msra.mxu0 0.0
  %1706 = vmatprep.subr.mxu0 0.0
  %1707 = vmatpush1.msra.mxu0 0.0
  %1708 = vmatprep.subr.mxu0 0.0
  %1709 = vmatpush1.msra.mxu0 0.0
  %1710 = vmatprep.subr.mxu0 0.0
  %1711 = vmatpush1.msra.mxu0 0.0
  %1712 = vmatprep.subr.mxu0 0.0
  %1713 = vmatpush1.msra.mxu0 0.0
  %1714 = vmatprep.subr.mxu0 0.0
  %1715 = vmatpush1.msra.mxu0 0.0
  %1716 = vmatprep.subr.mxu0 0.0
  %1717 = vmatpush1.msra.mxu0 0.0
  %1718 = vmatprep.subr.mxu0 0.0
  %1719 = vmatpush1.msra.mxu0 0.0
  %1720 = vmatprep.subr.mxu0 0.0
  %1721 = vmatpush1.msra.mxu0 0.0
  %1722 = vmatprep.subr.mxu0 0.0
  %1723 = vmatpush1.msra.mxu0 0.0
  %1724 = vmatprep.subr.mxu0 0.0
  %1725 = vmatpush1.msra.mxu0 0.0
  %1726 = vmatprep.subr.mxu0 0.0
  %1727 = vmatpush1.msra.mxu0 0.0
  %1728 = vmatprep.subr.mxu0 0.0
  %1729 = vmatpush1.msra.mxu0 0.0
  %1730 = vmatprep.subr.mxu0 0.0
  %1731 = vmatpush1.msra.mxu0 0.0
  %1732 = vmatprep.subr.mxu0 0.0
  %1733 = vmatpush1.msra.mxu0 0.0
  %1734 = vmatprep.subr.mxu0 0.0
  %1735 = vmatpush1.msra.mxu0 0.0
  %1736 = vmatprep.subr.mxu0 0.0
  %1737 = vmatpush1.msra.mxu0 0.0
  %1738 = vmatprep.subr.mxu0 0.0
  %1739 = vmatpush1.msra.mxu0 0.0
  %1740 = vmatprep.subr.mxu0 0.0
  %1741 = vmatpush1.msra.mxu0 0.0
  %1742 = vmatprep.mubr.f32.mxu0 0.0
  %1743 = vmatmul.mubr.f32.gmra.mrb[0].mxu0 %v1676
  %v1744 = vpop.f32.mrb[0].mxu0
  %v1745 = vadd.f32 0.0, %v1744
  %v1746 = vpop.f32.mrb[0].mxu0
  %1747 = vdwg.mxu0
  %v1748 = vsel %vm1053, %v1367, 0
  %1750 = vmatprep.subr.mxu0 0.0
  %1751 = vmatpush1.msra.mxu0 %v1658
  %1752 = vmatprep.subr.mxu0 0.0
  %1753 = vmatpush1.msra.mxu0 %v1659
  %1754 = vmatprep.subr.mxu0 0.0
  %1755 = vmatpush1.msra.mxu0 %v1660
  %1756 = vmatprep.subr.mxu0 0.0
  %1757 = vmatpush1.msra.mxu0 %v1661
  %1758 = vmatprep.subr.mxu0 0.0
  %1759 = vmatpush1.msra.mxu0 %v1662
  %1760 = vmatprep.subr.mxu0 0.0
  %1761 = vmatpush1.msra.mxu0 %v1663
  %1762 = vmatprep.subr.mxu0 0.0
  %1763 = vmatpush1.msra.mxu0 %v1664
  %1764 = vmatprep.subr.mxu0 0.0
  %1765 = vmatpush1.msra.mxu0 %v1665
  %1766 = vmatprep.subr.mxu0 0.0
  %1767 = vmatpush1.msra.mxu0 0.0
  %1768 = vmatprep.subr.mxu0 0.0
  %1769 = vmatpush1.msra.mxu0 0.0
  %1770 = vmatprep.subr.mxu0 0.0
  %1771 = vmatpush1.msra.mxu0 0.0
  %1772 = vmatprep.subr.mxu0 0.0
  %1773 = vmatpush1.msra.mxu0 0.0
  %1774 = vmatprep.subr.mxu0 0.0
  %1775 = vmatpush1.msra.mxu0 0.0
  %1776 = vmatprep.subr.mxu0 0.0
  %1777 = vmatpush1.msra.mxu0 0.0
  %1778 = vmatprep.subr.mxu0 0.0
  %1779 = vmatpush1.msra.mxu0 0.0
  %1780 = vmatprep.subr.mxu0 0.0
  %1781 = vmatpush1.msra.mxu0 0.0
  %1782 = vmatprep.subr.mxu0 0.0
  %1783 = vmatpush1.msra.mxu0 0.0
  %1784 = vmatprep.subr.mxu0 0.0
  %1785 = vmatpush1.msra.mxu0 0.0
  %1786 = vmatprep.subr.mxu0 0.0
  %1787 = vmatpush1.msra.mxu0 0.0
  %1788 = vmatprep.subr.mxu0 0.0
  %1789 = vmatpush1.msra.mxu0 0.0
  %1790 = vmatprep.subr.mxu0 0.0
  %1791 = vmatpush1.msra.mxu0 0.0
  %1792 = vmatprep.subr.mxu0 0.0
  %1793 = vmatpush1.msra.mxu0 0.0
  %1794 = vmatprep.subr.mxu0 0.0
  %1795 = vmatpush1.msra.mxu0 0.0
  %1796 = vmatprep.subr.mxu0 0.0
  %1797 = vmatpush1.msra.mxu0 0.0
  %1798 = vmatprep.subr.mxu0 0.0
  %1799 = vmatpush1.msra.mxu0 0.0
  %1800 = vmatprep.subr.mxu0 0.0
  %1801 = vmatpush1.msra.mxu0 0.0
  %1802 = vmatprep.subr.mxu0 0.0
  %1803 = vmatpush1.msra.mxu0 0.0
  %1804 = vmatprep.subr.mxu0 0.0
  %1805 = vmatpush1.msra.mxu0 0.0
  %1806 = vmatprep.subr.mxu0 0.0
  %1807 = vmatpush1.msra.mxu0 0.0
  %1808 = vmatprep.subr.mxu0 0.0
  %1809 = vmatpush1.msra.mxu0 0.0
  %1810 = vmatprep.subr.mxu0 0.0
  %1811 = vmatpush1.msra.mxu0 0.0
  %1812 = vmatprep.subr.mxu0 0.0
  %1813 = vmatpush1.msra.mxu0 0.0
  %1814 = vmatprep.mubr.f32.mxu0 0.0
  %1815 = vmatmul.mubr.f32.gmra.mrb[0].mxu0 %v1748
  %v1816 = vpop.f32.mrb[0].mxu0
  %v1817 = vadd.f32 %v1745, %v1816
  %v1818 = vpop.f32.mrb[0].mxu0
  %1819 = vdwg.mxu0
  %v1820 = vld [vmem:[%s1 + $0x228] sm:$0xff]
  %v1821 = vld [vmem:[%s1 + $0x230] sm:$0xff]
  %v1822 = vld [vmem:[%s1 + $0x238] sm:$0xff]
  %v1823 = vld [vmem:[%s1 + $0x240] sm:$0xff]
  %v1824 = vld [vmem:[%s1 + $0x248] sm:$0xff]
  %v1825 = vld [vmem:[%s1 + $0x250] sm:$0xff]
  %v1826 = vld [vmem:[%s1 + $0x258] sm:$0xff]
  %v1827 = vld [vmem:[%s1 + $0x260] sm:$0xff]
  %v1829 = vsel %vm1053, %v1657, 0
  %1831 = vmatprep.subr.mxu0 0.0
  %1832 = vmatpush1.msra.mxu0 %v1820
  %1833 = vmatprep.subr.mxu0 0.0
  %1834 = vmatpush1.msra.mxu0 %v1821
  %1835 = vmatprep.subr.mxu0 0.0
  %1836 = vmatpush1.msra.mxu0 %v1822
  %1837 = vmatprep.subr.mxu0 0.0
  %1838 = vmatpush1.msra.mxu0 %v1823
  %1839 = vmatprep.subr.mxu0 0.0
  %1840 = vmatpush1.msra.mxu0 %v1824
  %1841 = vmatprep.subr.mxu0 0.0
  %1842 = vmatpush1.msra.mxu0 %v1825
  %1843 = vmatprep.subr.mxu0 0.0
  %1844 = vmatpush1.msra.mxu0 %v1826
  %1845 = vmatprep.subr.mxu0 0.0
  %1846 = vmatpush1.msra.mxu0 %v1827
  %1847 = vmatprep.subr.mxu0 0.0
  %1848 = vmatpush1.msra.mxu0 0.0
  %1849 = vmatprep.subr.mxu0 0.0
  %1850 = vmatpush1.msra.mxu0 0.0
  %1851 = vmatprep.subr.mxu0 0.0
  %1852 = vmatpush1.msra.mxu0 0.0
  %1853 = vmatprep.subr.mxu0 0.0
  %1854 = vmatpush1.msra.mxu0 0.0
  %1855 = vmatprep.subr.mxu0 0.0
  %1856 = vmatpush1.msra.mxu0 0.0
  %1857 = vmatprep.subr.mxu0 0.0
  %1858 = vmatpush1.msra.mxu0 0.0
  %1859 = vmatprep.subr.mxu0 0.0
  %1860 = vmatpush1.msra.mxu0 0.0
  %1861 = vmatprep.subr.mxu0 0.0
  %1862 = vmatpush1.msra.mxu0 0.0
  %1863 = vmatprep.subr.mxu0 0.0
  %1864 = vmatpush1.msra.mxu0 0.0
  %1865 = vmatprep.subr.mxu0 0.0
  %1866 = vmatpush1.msra.mxu0 0.0
  %1867 = vmatprep.subr.mxu0 0.0
  %1868 = vmatpush1.msra.mxu0 0.0
  %1869 = vmatprep.subr.mxu0 0.0
  %1870 = vmatpush1.msra.mxu0 0.0
  %1871 = vmatprep.subr.mxu0 0.0
  %1872 = vmatpush1.msra.mxu0 0.0
  %1873 = vmatprep.subr.mxu0 0.0
  %1874 = vmatpush1.msra.mxu0 0.0
  %1875 = vmatprep.subr.mxu0 0.0
  %1876 = vmatpush1.msra.mxu0 0.0
  %1877 = vmatprep.subr.mxu0 0.0
  %1878 = vmatpush1.msra.mxu0 0.0
  %1879 = vmatprep.subr.mxu0 0.0
  %1880 = vmatpush1.msra.mxu0 0.0
  %1881 = vmatprep.subr.mxu0 0.0
  %1882 = vmatpush1.msra.mxu0 0.0
  %1883 = vmatprep.subr.mxu0 0.0
  %1884 = vmatpush1.msra.mxu0 0.0
  %1885 = vmatprep.subr.mxu0 0.0
  %1886 = vmatpush1.msra.mxu0 0.0
  %1887 = vmatprep.subr.mxu0 0.0
  %1888 = vmatpush1.msra.mxu0 0.0
  %1889 = vmatprep.subr.mxu0 0.0
  %1890 = vmatpush1.msra.mxu0 0.0
  %1891 = vmatprep.subr.mxu0 0.0
  %1892 = vmatpush1.msra.mxu0 0.0
  %1893 = vmatprep.subr.mxu0 0.0
  %1894 = vmatpush1.msra.mxu0 0.0
  %1895 = vmatprep.mubr.f32.mxu0 0.0
  %1896 = vmatmul.mubr.f32.gmra.mrb[0].mxu0 %v1829
  %v1897 = vpop.f32.mrb[0].mxu0
  %v1898 = vadd.f32 0.0, %v1897
  %v1899 = vpop.f32.mrb[0].mxu0
  %1900 = vdwg.mxu0
  %v1901 = vadd.f32 %v1817, %v1898
  %v1902 = vld [vmem:[%s1 + $0x268] sm:$0xff]
  %v1903 = vld [vmem:[%s1 + $0x270] sm:$0xff]
  %v1904 = vld [vmem:[%s1 + $0x278] sm:$0xff]
  %v1905 = vld [vmem:[%s1 + $0x280] sm:$0xff]
  %v1906 = vld [vmem:[%s1 + $0x288] sm:$0xff]
  %v1907 = vld [vmem:[%s1 + $0x290] sm:$0xff]
  %v1908 = vld [vmem:[%s1 + $0x298] sm:$0xff]
  %v1909 = vld [vmem:[%s1 + $0x2a0] sm:$0xff]
  %v1910 = vrot.slane %v1657, 2
  %v1911 = vsel %vm1053, %v1910, 0
  %1913 = vmatprep.subr.mxu0 0.0
  %1914 = vmatpush1.msra.mxu0 %v1902
  %1915 = vmatprep.subr.mxu0 0.0
  %1916 = vmatpush1.msra.mxu0 %v1903
  %1917 = vmatprep.subr.mxu0 0.0
  %1918 = vmatpush1.msra.mxu0 %v1904
  %1919 = vmatprep.subr.mxu0 0.0
  %1920 = vmatpush1.msra.mxu0 %v1905
  %1921 = vmatprep.subr.mxu0 0.0
  %1922 = vmatpush1.msra.mxu0 %v1906
  %1923 = vmatprep.subr.mxu0 0.0
  %1924 = vmatpush1.msra.mxu0 %v1907
  %1925 = vmatprep.subr.mxu0 0.0
  %1926 = vmatpush1.msra.mxu0 %v1908
  %1927 = vmatprep.subr.mxu0 0.0
  %1928 = vmatpush1.msra.mxu0 %v1909
  %1929 = vmatprep.subr.mxu0 0.0
  %1930 = vmatpush1.msra.mxu0 0.0
  %1931 = vmatprep.subr.mxu0 0.0
  %1932 = vmatpush1.msra.mxu0 0.0
  %1933 = vmatprep.subr.mxu0 0.0
  %1934 = vmatpush1.msra.mxu0 0.0
  %1935 = vmatprep.subr.mxu0 0.0
  %1936 = vmatpush1.msra.mxu0 0.0
  %1937 = vmatprep.subr.mxu0 0.0
  %1938 = vmatpush1.msra.mxu0 0.0
  %1939 = vmatprep.subr.mxu0 0.0
  %1940 = vmatpush1.msra.mxu0 0.0
  %1941 = vmatprep.subr.mxu0 0.0
  %1942 = vmatpush1.msra.mxu0 0.0
  %1943 = vmatprep.subr.mxu0 0.0
  %1944 = vmatpush1.msra.mxu0 0.0
  %1945 = vmatprep.subr.mxu0 0.0
  %1946 = vmatpush1.msra.mxu0 0.0
  %1947 = vmatprep.subr.mxu0 0.0
  %1948 = vmatpush1.msra.mxu0 0.0
  %1949 = vmatprep.subr.mxu0 0.0
  %1950 = vmatpush1.msra.mxu0 0.0
  %1951 = vmatprep.subr.mxu0 0.0
  %1952 = vmatpush1.msra.mxu0 0.0
  %1953 = vmatprep.subr.mxu0 0.0
  %1954 = vmatpush1.msra.mxu0 0.0
  %1955 = vmatprep.subr.mxu0 0.0
  %1956 = vmatpush1.msra.mxu0 0.0
  %1957 = vmatprep.subr.mxu0 0.0
  %1958 = vmatpush1.msra.mxu0 0.0
  %1959 = vmatprep.subr.mxu0 0.0
  %1960 = vmatpush1.msra.mxu0 0.0
  %1961 = vmatprep.subr.mxu0 0.0
  %1962 = vmatpush1.msra.mxu0 0.0
  %1963 = vmatprep.subr.mxu0 0.0
  %1964 = vmatpush1.msra.mxu0 0.0
  %1965 = vmatprep.subr.mxu0 0.0
  %1966 = vmatpush1.msra.mxu0 0.0
  %1967 = vmatprep.subr.mxu0 0.0
  %1968 = vmatpush1.msra.mxu0 0.0
  %1969 = vmatprep.subr.mxu0 0.0
  %1970 = vmatpush1.msra.mxu0 0.0
  %1971 = vmatprep.subr.mxu0 0.0
  %1972 = vmatpush1.msra.mxu0 0.0
  %1973 = vmatprep.subr.mxu0 0.0
  %1974 = vmatpush1.msra.mxu0 0.0
  %1975 = vmatprep.subr.mxu0 0.0
  %1976 = vmatpush1.msra.mxu0 0.0
  %1977 = vmatprep.mubr.f32.mxu0 0.0
  %1978 = vmatmul.mubr.f32.gmra.mrb[0].mxu0 %v1911
  %v1979 = vpop.f32.mrb[0].mxu0
  %v1980 = vadd.f32 0.0, %v1979
  %v1981 = vpop.f32.mrb[0].mxu0
  %1982 = vdwg.mxu0
  %v1983 = vadd.f32 %v1901, %v1980
  %v1984 = vlaneseq
  %v1985 = vshrl.u32 %v1984, 7
  %v1986 = vsub.s32 0, %v1985
  %v1987 = vrot.slane %v17, %v1986
  %v1988 = vadd.f32 %v1983, %v1987
  %v1989 = vmax.f32 %v1988, 0.0
  %v1990 = vld [vmem:[%s1 + $0x2a8] sm:$0xff]
  %v1991 = vld [vmem:[%s1 + $0x2b0] sm:$0xff]
  %v1992 = vld [vmem:[%s1 + $0x2b8] sm:$0xff]
  %v1993 = vld [vmem:[%s1 + $0x2c0] sm:$0xff]
  %v1994 = vld [vmem:[%s1 + $0x2c8] sm:$0xff]
  %v1995 = vld [vmem:[%s1 + $0x2d0] sm:$0xff]
  %v1996 = vld [vmem:[%s1 + $0x2d8] sm:$0xff]
  %v1997 = vld [vmem:[%s1 + $0x2e0] sm:$0xff]
  %v1998 = vld [vmem:[%s1 + $0x2e8] sm:$0xff]
  %v1999 = vld [vmem:[%s1 + $0x2f0] sm:$0xff]
  %v2000 = vld [vmem:[%s1 + $0x2f8] sm:$0xff]
  %v2001 = vld [vmem:[%s1 + $0x300] sm:$0xff]
  %v2002 = vld [vmem:[%s1 + $0x308] sm:$0xff]
  %v2003 = vld [vmem:[%s1 + $0x310] sm:$0xff]
  %v2004 = vld [vmem:[%s1 + $0x318] sm:$0xff]
  %v2005 = vld [vmem:[%s1 + $0x320] sm:$0xff]
  %v2006 = vlaneseq
  %v2007 = vshrl.u32 %v2006, 7
  %v2008 = vsub.s32 0, %v2007
  %v2009 = vrot.slane %v18, %v2008
  %2010 = vmatprep.subr.mxu0 0.0
  %2011 = vmatpush1.msra.mxu0 %v1990
  %2012 = vmatprep.subr.mxu0 0.0
  %2013 = vmatpush1.msra.mxu0 %v1991
  %2014 = vmatprep.subr.mxu0 0.0
  %2015 = vmatpush1.msra.mxu0 %v1992
  %2016 = vmatprep.subr.mxu0 0.0
  %2017 = vmatpush1.msra.mxu0 %v1993
  %2018 = vmatprep.subr.mxu0 0.0
  %2019 = vmatpush1.msra.mxu0 %v1994
  %2020 = vmatprep.subr.mxu0 0.0
  %2021 = vmatpush1.msra.mxu0 %v1995
  %2022 = vmatprep.subr.mxu0 0.0
  %2023 = vmatpush1.msra.mxu0 %v1996
  %2024 = vmatprep.subr.mxu0 0.0
  %2025 = vmatpush1.msra.mxu0 %v1997
  %2026 = vmatprep.subr.mxu0 0.0
  %2027 = vmatpush1.msra.mxu0 %v1998
  %2028 = vmatprep.subr.mxu0 0.0
  %2029 = vmatpush1.msra.mxu0 %v1999
  %2030 = vmatprep.subr.mxu0 0.0
  %2031 = vmatpush1.msra.mxu0 %v2000
  %2032 = vmatprep.subr.mxu0 0.0
  %2033 = vmatpush1.msra.mxu0 %v2001
  %2034 = vmatprep.subr.mxu0 0.0
  %2035 = vmatpush1.msra.mxu0 %v2002
  %2036 = vmatprep.subr.mxu0 0.0
  %2037 = vmatpush1.msra.mxu0 %v2003
  %2038 = vmatprep.subr.mxu0 0.0
  %2039 = vmatpush1.msra.mxu0 %v2004
  %2040 = vmatprep.subr.mxu0 0.0
  %2041 = vmatpush1.msra.mxu0 %v2005
  %2042 = vmatprep.subr.mxu0 0.0
  %2043 = vmatpush1.msra.mxu0 0.0
  %2044 = vmatprep.subr.mxu0 0.0
  %2045 = vmatpush1.msra.mxu0 0.0
  %2046 = vmatprep.subr.mxu0 0.0
  %2047 = vmatpush1.msra.mxu0 0.0
  %2048 = vmatprep.subr.mxu0 0.0
  %2049 = vmatpush1.msra.mxu0 0.0
  %2050 = vmatprep.subr.mxu0 0.0
  %2051 = vmatpush1.msra.mxu0 0.0
  %2052 = vmatprep.subr.mxu0 0.0
  %2053 = vmatpush1.msra.mxu0 0.0
  %2054 = vmatprep.subr.mxu0 0.0
  %2055 = vmatpush1.msra.mxu0 0.0
  %2056 = vmatprep.subr.mxu0 0.0
  %2057 = vmatpush1.msra.mxu0 0.0
  %2058 = vmatprep.subr.mxu0 0.0
  %2059 = vmatpush1.msra.mxu0 0.0
  %2060 = vmatprep.subr.mxu0 0.0
  %2061 = vmatpush1.msra.mxu0 0.0
  %2062 = vmatprep.subr.mxu0 0.0
  %2063 = vmatpush1.msra.mxu0 0.0
  %2064 = vmatprep.subr.mxu0 0.0
  %2065 = vmatpush1.msra.mxu0 0.0
  %2066 = vmatprep.subr.mxu0 0.0
  %2067 = vmatpush1.msra.mxu0 0.0
  %2068 = vmatprep.subr.mxu0 0.0
  %2069 = vmatpush1.msra.mxu0 0.0
  %2070 = vmatprep.subr.mxu0 0.0
  %2071 = vmatpush1.msra.mxu0 0.0
  %2072 = vmatprep.subr.mxu0 0.0
  %2073 = vmatpush1.msra.mxu0 0.0
  %2074 = vmatprep.mubr.f32.mxu0 0.0
  %2075 = vmatmul.mubr.f32.gmra.mrb[0].mxu0 %v1989
  %v2076 = vpop.f32.mrb[0].mxu0
  %v2077 = vadd.f32 %v2009, %v2076
  %v2078 = vpop.f32.mrb[0].mxu0
  %2079 = vdwg.mxu0
  %v2080 = vlaneseq
  %v2081 = vand.u32 %v2080, 127
  %vm2082 = vcmp.lt.s32.totalorder %v2081, 6
  %v2083 = vsel %vm2082, %v2077, -1e+30
  %vm2084 = vcmask 1041408
  %v2085 = vsel %vm2084, %v2083, -inf
  %2086 = vmax.xlane.f32.xlu0 %v2085
  %v2087 = vpop.xlane.xlu0 %2086
  %v2088 = vsub.f32 %v2077, %v2087
  %v2089 = vmul.f32 %v2088, 1.442695
  %v2090 = vpow.pop %v2089
  %v2091 = vsel %vm2082, %v2090, 0.0
  %v2092 = vsel %vm2084, %v2091, 0.0
  %2093 = vadd.xlane.f32.xlu0 %v2092
  %v2094 = vpop.xlane.xlu0 %2093
  %v2095 = vrcp.pop %v2094
  %v2096 = vmul.f32 %v2091, %v2095
  %vm2097 = vcmp.eq.s32.totalorder %v2081, 6
  %v2098 = vsel %vm2097, %v2077, 0.0
  %v2099 = vsel %vm2082, %v2096, %v2098
  %2100 = vst [vmem:[%s3] sm:$0x3] %v2099
  // Predicated region
  $region14: #{action_and_value.1} parent=0 // pred_check
    _
  $region15: #{action_and_value.1} parent=0 // pred_check_branch
    %2102 = sbr.rel (0) target = $region17
  $region16: #{action_and_value.1} parent=0 // pred_region
    _
  $region17: #{action_and_value.1} parent=0 // pred_fallthru
    _
  // Predicated region
  $region18: #{action_and_value.1} parent=0 // pred_check
    _
  $region19: #{action_and_value.1} parent=0 // pred_check_branch
    %2104 = sbr.rel (0) target = $region21
  $region20: #{action_and_value.1} parent=0 // pred_region
    _
  $region21: #{action_and_value.1} parent=0 // pred_fallthru
    _

</llo_original>
